<compile_context>
chip_gen: v5e
topology: v5e:2x2
jax: 0.10.0
libtpu: 0.0.40
codegen_flags: <defaults>
</compile_context>

<pallas_src>
import jax
import jax.numpy as jnp
from jax.experimental import pallas as pl
from jax.experimental.pallas import tpu as pltpu

HIDDEN = 100        # hidden width of the original module
H_PAD = 128         # lane-aligned padded hidden width (per group)
N_LAYERS = 9        # 8x (Linear + ReLU) + final Linear(100, 1)


def _cdiv(a, b):
    return -(-a // b)


def _round_up(a, b):
    return _cdiv(a, b) * b


def mlp_kernel(x_ref, w0_ref, wh_ref, b_ref, out_ref):
    """One batch-column tile of the whole 9-layer MLP, feature-major.

    With G = n_groups (1 on v5e, 2 to fill the 256-wide MXU on v6e/v7x):
      x_ref  : (G*K_PAD, TILE_B)        bf16  transposed, zero-padded input
      w0_ref : (G*H_PAD, G*K_PAD)       bf16  layer-0 weight (block-diag if G=2)
      wh_ref : (8, G*H_PAD, G*H_PAD)    bf16  layers 1..8 weights (block-diag)
      b_ref  : (9, G*H_PAD, 1)          f32   biases as feature columns
      out_ref: (G, TILE_B)              f32   lane-dense output rows
                                              (row g = feature row g*H_PAD)
    """
    n_groups = out_ref.shape[0]
    gh = wh_ref.shape[1] // n_groups          # padded hidden width per group

    # Layer 0: (G*H, G*K) @ (G*K, TILE_B) on the MXU, f32 accumulation.
    h = jnp.dot(w0_ref[...], x_ref[...], preferred_element_type=jnp.float32)
    h = jnp.maximum(h + b_ref[0], 0.0)

    n_rest = wh_ref.shape[0]                  # 8 remaining layers, unrolled
    for l in range(n_rest):
        h = jnp.dot(wh_ref[l], h.astype(jnp.bfloat16),
                    preferred_element_type=jnp.float32)
        h = h + b_ref[l + 1]
        if l < n_rest - 1:                    # no ReLU after the last Linear
            h = jnp.maximum(h, 0.0)

    # Feature row g*gh of group g carries its Linear(100,1) output (padded
    # weight rows are zero) -> lane-dense (n_groups, TILE_B) unmasked store.
    if n_groups == 1:
        out_ref[...] = h[0:1, :]
    else:
        out_ref[...] = jnp.concatenate(
            [h[g * gh:g * gh + 1, :] for g in range(n_groups)], axis=0)


def _blockdiag2(w):
    """(..., R, C) -> (..., 2R, 2C) with two copies of w on the diagonal."""
    z = jnp.zeros_like(w)
    top = jnp.concatenate([w, z], axis=-1)
    bot = jnp.concatenate([z, w], axis=-1)
    return jnp.concatenate([top, bot], axis=-2)


def preferred_n_groups():
    """2 (pack two half-batches block-diagonally to fill the 256-wide MXU) on
    v6e / v7x; 1 (native 128x128 MXU) on v5e or unknown hardware."""
    try:
        kind = jax.devices()[0].device_kind.lower()
    except Exception:
        return 1
    return 2 if ("v6" in kind or "v7" in kind or "7x" in kind) else 1


def pack_params(params, *, n_groups=None):
    """Zero-pad + stack PyTorch-layout (out, in) weights for the kernel.

    Returns (w0, wh, b, nbands):
      w0: (G*H_PAD, G*K_PAD)             bf16  (block-diagonal if G == 2)
      wh: (N_LAYERS-1, G*H_PAD, G*H_PAD) bf16  (block-diagonal if G == 2)
      b : (N_LAYERS, G*H_PAD, 1)         f32
    K_PAD = nbands rounded up to 16 (bf16 sublane multiple), NOT 128, so the
    per-sample input DMA is only 2*K_PAD bytes.  All padding is exact zeros,
    so the padded / block-diagonal network computes the original values.
    """
    if n_groups is None:
        n_groups = preferred_n_groups()
    assert n_groups in (1, 2)
    assert len(params) == N_LAYERS

    nbands = params[0][0].shape[1]
    k_pad = _round_up(nbands, 16)             # bf16 sublane multiple, not 128

    w0 = jnp.zeros((H_PAD, k_pad), jnp.float32)
    w0 = w0.at[: params[0][0].shape[0], :nbands].set(params[0][0])

    wh = jnp.zeros((N_LAYERS - 1, H_PAD, H_PAD), jnp.float32)
    b = jnp.zeros((N_LAYERS, H_PAD, 1), jnp.float32)
    b = b.at[0, : params[0][1].shape[0], 0].set(params[0][1])
    for l in range(1, N_LAYERS):
        w_l, b_l = params[l]
        wh = wh.at[l - 1, : w_l.shape[0], : w_l.shape[1]].set(w_l)
        b = b.at[l, : b_l.shape[0], 0].set(b_l)

    if n_groups == 2:                          # fill the 256-wide MXU (v6e/v7x)
        w0 = _blockdiag2(w0)
        wh = _blockdiag2(wh)
        b = jnp.concatenate([b, b], axis=1)

    return w0.astype(jnp.bfloat16), wh.astype(jnp.bfloat16), b, nbands


def _choose_tile_b(cols_needed, *, target_tiles=4, max_tile_b=1024):
    """>= target_tiles grid steps (2 per v7x TensorCore + DMA double-buffering),
    128-lane aligned, capped so huge batches amortize per-step overhead while
    staying friendly to v5e's single vector-store slot."""
    tile = _round_up(_cdiv(max(cols_needed, 1), target_tiles), 128)
    return max(128, min(tile, max_tile_b))


def neutral_network_forward(x, packed, *, tile_b=None, max_tile_b=1024):
    """x: (batch, number_bands) float32.  packed = pack_params(params)."""
    w0, wh, b, nbands = packed
    n_groups = b.shape[1] // H_PAD
    gh = n_groups * H_PAD                      # padded hidden width, all groups
    gk = w0.shape[1]                           # n_groups * k_pad
    k_pad = gk // n_groups

    batch, xbands = x.shape
    assert xbands == nbands, (
        f"x has {xbands} bands but the packed parameters expect {nbands}")

    # Batch is split into n_groups independent half-batches; group g, column c
    # holds sample s = g*cols + c.
    cols_needed = _cdiv(batch, n_groups)
    if tile_b is None:
        tile_b = _choose_tile_b(cols_needed, max_tile_b=max_tile_b)
    n_tiles = _cdiv(cols_needed, tile_b)
    cols = n_tiles * tile_b

    # Feature-major bf16 input slab (G*K_PAD, cols): zero-padded, tiny compared
    # to the old f32 / 128-wide-K slab.
    x_bf16 = x.astype(jnp.bfloat16)
    x_t = jnp.zeros((gk, cols), jnp.bfloat16)
    for g in range(n_groups):
        lo = g * cols
        cnt = min(max(batch - lo, 0), cols)
        if cnt > 0:
            x_t = x_t.at[g * k_pad:g * k_pad + nbands, :cnt].set(
                x_bf16[lo:lo + cnt].T)

    cols_total = n_tiles * tile_b
    flops = 2 * cols_total * (gh * gk + (N_LAYERS - 1) * gh * gh)
    bytes_accessed = (x_t.size * 2 + n_groups * cols * 4
                      + w0.size * 2 + wh.size * 2 + b.size * 4)

    out = pl.pallas_call(
        mlp_kernel,
        out_shape=jax.ShapeDtypeStruct((n_groups, cols), jnp.float32),
        grid=(n_tiles,),
        in_specs=[
            # x tile: new block per grid step -> double-buffered DMA.
            pl.BlockSpec((gk, tile_b), lambda i: (0, i)),
            # Parameters: constant block index -> DMA'd once, VMEM-resident.
            # (pl.Buffered(1) single-buffering skipped: low priority, ~1 MiB.)
            pl.BlockSpec((gh, gk), lambda i: (0, 0)),
            pl.BlockSpec((N_LAYERS - 1, gh, gh), lambda i: (0, 0, 0)),
            pl.BlockSpec((N_LAYERS, gh, 1), lambda i: (0, 0, 0)),
        ],
        out_specs=pl.BlockSpec((n_groups, tile_b), lambda i: (0, i)),  # lane-dense
        compiler_params=pltpu.CompilerParams(
            dimension_semantics=("parallel",),     # megacore / v7x 2-TC shard
            vmem_limit_bytes=32 * 1024 * 1024,     # residency is ~1-3 MiB anyway
        ),
        cost_estimate=pl.CostEstimate(
            flops=flops, transcendentals=0, bytes_accessed=bytes_accessed),
    )(x_t, w0, wh, b)

    # Row g, column c  <->  sample g*cols + c.
    return out.reshape(-1)[:batch].reshape(batch, 1)


def init_params(key, number_bands):
    """nn.Linear default init, weights in PyTorch (out, in) layout."""
    dims = [number_bands] + [HIDDEN] * (N_LAYERS - 1) + [1]
    params = []
    for i in range(N_LAYERS):
        fan_in, fan_out = dims[i], dims[i + 1]
        key, kw, kb = jax.random.split(key, 3)
        bound = 1.0 / jnp.sqrt(jnp.float32(fan_in))
        w = jax.random.uniform(kw, (fan_out, fan_in), jnp.float32, -bound, bound)
        b = jax.random.uniform(kb, (fan_out,), jnp.float32, -bound, bound)
        params.append((w, b))
    return params


def reference_forward_f32(x, params):
    """Pure-JAX f32 reference matching the PyTorch module exactly."""
    h = x.astype(jnp.float32)
    for i, (w, b) in enumerate(params):
        h = h @ w.T + b
        if i < len(params) - 1:
            h = jnp.maximum(h, 0.0)
    return h


def reference_forward_bf16(x, params):
    """Reference with the kernel's precision: bf16 MXU inputs, f32 accumulation."""
    h = x.astype(jnp.float32)
    for i, (w, b) in enumerate(params):
        h = jnp.dot(h.astype(jnp.bfloat16), w.T.astype(jnp.bfloat16),
                    preferred_element_type=jnp.float32) + b
        if i < len(params) - 1:
            h = jnp.maximum(h, 0.0)
    return h


if __name__ == "__main__":
    number_bands = 16
    batch = 200

    key = jax.random.PRNGKey(0)
    key, kx = jax.random.split(key)
    x = jax.random.normal(kx, (batch, number_bands), dtype=jnp.float32)
    params = init_params(key, number_bands)

    ref_bf16 = reference_forward_bf16(x, params)   # kernel's exact precision
    ref_f32 = reference_forward_f32(x, params)     # original f32 module math

    # n_groups=1: native 128x128 MXU path (v5e).
    # n_groups=2: 256-wide MXU fill via block-diagonal packing (v6e / v7x).
    # Both are numerically identical; in production pick preferred_n_groups().
    for ng in (1, 2):
        packed = pack_params(params, n_groups=ng)
        out = jax.block_until_ready(neutral_network_forward(x, packed))
        assert out.shape == (batch, 1), out.shape

        err_bf16 = float(jnp.max(jnp.abs(out - ref_bf16)))
        assert jnp.allclose(out, ref_bf16, atol=2e-3, rtol=2e-3), (
            f"n_groups={ng}: max abs err vs matched-precision ref = {err_bf16}")

        err_f32 = float(jnp.max(jnp.abs(out - ref_f32)))
        assert jnp.allclose(out, ref_f32, atol=5e-2, rtol=5e-2), (
            f"n_groups={ng}: max abs err vs f32 ref = {err_f32}")

    print("KERNEL_OK")
</pallas_src>

<mosaic_0001>
module attributes {stable_mosaic.version = 11 : i64} {
  func.func @mlp_kernel(%arg0: i32, %arg1: memref<16x128xbf16, #tpu.memory_space<vmem>>, %arg2: memref<128x16xbf16, #tpu.memory_space<vmem>>, %arg3: memref<8x128x128xbf16, #tpu.memory_space<vmem>>, %arg4: memref<9x128x1xf32, #tpu.memory_space<vmem>>, %arg5: memref<1x128xf32, #tpu.memory_space<vmem>>) attributes {dimension_semantics = [#tpu.dimension_semantics<parallel>], iteration_bounds = array<i64: 2>, scalar_prefetch = 0 : i64, scratch_operands = 0 : i64, tpu.core_type = #tpu.core_type<tc>, window_params = [{transform_indices = @transform_0, window_bounds = array<i64: 16, 128>}, {pipeline_mode = #tpu.pipeline_mode<synchronous>, transform_indices = @transform_1, window_bounds = array<i64: 128, 16>}, {pipeline_mode = #tpu.pipeline_mode<synchronous>, transform_indices = @transform_2, window_bounds = array<i64: 8, 128, 128>}, {pipeline_mode = #tpu.pipeline_mode<synchronous>, transform_indices = @transform_3, window_bounds = array<i64: 9, 128, 1>}, {transform_indices = @transform_4, window_bounds = array<i64: 1, 128>}]} {
    %c0 = arith.constant 0 : index
    %c0_0 = arith.constant 0 : index
    %0 = vector.load %arg2[%c0, %c0_0] : memref<128x16xbf16, #tpu.memory_space<vmem>>, vector<128x16xbf16>
    %c0_1 = arith.constant 0 : index
    %c0_2 = arith.constant 0 : index
    %1 = vector.load %arg1[%c0_1, %c0_2] : memref<16x128xbf16, #tpu.memory_space<vmem>>, vector<16x128xbf16>
    %cst = arith.constant dense<0.000000e+00> : vector<128x128xf32>
    %2 = tpu.matmul %0, %1, %cst {dimension_numbers = #tpu.dot_dimension_numbers<[1], [0], [0], [1], [0, 0, 1, 1], [], []>} : vector<128x16xbf16>, vector<16x128xbf16>, vector<128x128xf32> -> vector<128x128xf32>
    %c0_3 = arith.constant 0 : index
    %c0_4 = arith.constant 0 : index
    %c0_5 = arith.constant 0 : index
    %3 = vector.load %arg4[%c0_3, %c0_4, %c0_5] : memref<9x128x1xf32, #tpu.memory_space<vmem>>, vector<1x128x1xf32>
    %4 = vector.shape_cast %3 : vector<1x128x1xf32> to vector<128x1xf32>
    %5 = vector.broadcast %4 : vector<128x1xf32> to vector<128x128xf32>
    %6 = arith.addf %2, %5 : vector<128x128xf32>
    %cst_6 = arith.constant 0.000000e+00 : f32
    %7 = vector.broadcast %cst_6 : f32 to vector<128x128xf32>
    %8 = arith.maximumf %6, %7 : vector<128x128xf32>
    %c0_7 = arith.constant 0 : index
    %c0_8 = arith.constant 0 : index
    %c0_9 = arith.constant 0 : index
    %9 = vector.load %arg3[%c0_7, %c0_8, %c0_9] : memref<8x128x128xbf16, #tpu.memory_space<vmem>>, vector<1x128x128xbf16>
    %10 = vector.shape_cast %9 : vector<1x128x128xbf16> to vector<128x128xbf16>
    %11 = arith.truncf %8 : vector<128x128xf32> to vector<128x128xbf16>
    %cst_10 = arith.constant dense<0.000000e+00> : vector<128x128xf32>
    %12 = tpu.matmul %10, %11, %cst_10 {dimension_numbers = #tpu.dot_dimension_numbers<[1], [0], [0], [1], [0, 0, 1, 1], [], []>} : vector<128x128xbf16>, vector<128x128xbf16>, vector<128x128xf32> -> vector<128x128xf32>
    %c1 = arith.constant 1 : index
    %c0_11 = arith.constant 0 : index
    %c0_12 = arith.constant 0 : index
    %13 = vector.load %arg4[%c1, %c0_11, %c0_12] : memref<9x128x1xf32, #tpu.memory_space<vmem>>, vector<1x128x1xf32>
    %14 = vector.shape_cast %13 : vector<1x128x1xf32> to vector<128x1xf32>
    %15 = vector.broadcast %14 : vector<128x1xf32> to vector<128x128xf32>
    %16 = arith.addf %12, %15 : vector<128x128xf32>
    %cst_13 = arith.constant 0.000000e+00 : f32
    %17 = vector.broadcast %cst_13 : f32 to vector<128x128xf32>
    %18 = arith.maximumf %16, %17 : vector<128x128xf32>
    %c1_14 = arith.constant 1 : index
    %c0_15 = arith.constant 0 : index
    %c0_16 = arith.constant 0 : index
    %19 = vector.load %arg3[%c1_14, %c0_15, %c0_16] : memref<8x128x128xbf16, #tpu.memory_space<vmem>>, vector<1x128x128xbf16>
    %20 = vector.shape_cast %19 : vector<1x128x128xbf16> to vector<128x128xbf16>
    %21 = arith.truncf %18 : vector<128x128xf32> to vector<128x128xbf16>
    %cst_17 = arith.constant dense<0.000000e+00> : vector<128x128xf32>
    %22 = tpu.matmul %20, %21, %cst_17 {dimension_numbers = #tpu.dot_dimension_numbers<[1], [0], [0], [1], [0, 0, 1, 1], [], []>} : vector<128x128xbf16>, vector<128x128xbf16>, vector<128x128xf32> -> vector<128x128xf32>
    %c2 = arith.constant 2 : index
    %c0_18 = arith.constant 0 : index
    %c0_19 = arith.constant 0 : index
    %23 = vector.load %arg4[%c2, %c0_18, %c0_19] : memref<9x128x1xf32, #tpu.memory_space<vmem>>, vector<1x128x1xf32>
    %24 = vector.shape_cast %23 : vector<1x128x1xf32> to vector<128x1xf32>
    %25 = vector.broadcast %24 : vector<128x1xf32> to vector<128x128xf32>
    %26 = arith.addf %22, %25 : vector<128x128xf32>
    %cst_20 = arith.constant 0.000000e+00 : f32
    %27 = vector.broadcast %cst_20 : f32 to vector<128x128xf32>
    %28 = arith.maximumf %26, %27 : vector<128x128xf32>
    %c2_21 = arith.constant 2 : index
    %c0_22 = arith.constant 0 : index
    %c0_23 = arith.constant 0 : index
    %29 = vector.load %arg3[%c2_21, %c0_22, %c0_23] : memref<8x128x128xbf16, #tpu.memory_space<vmem>>, vector<1x128x128xbf16>
    %30 = vector.shape_cast %29 : vector<1x128x128xbf16> to vector<128x128xbf16>
    %31 = arith.truncf %28 : vector<128x128xf32> to vector<128x128xbf16>
    %cst_24 = arith.constant dense<0.000000e+00> : vector<128x128xf32>
    %32 = tpu.matmul %30, %31, %cst_24 {dimension_numbers = #tpu.dot_dimension_numbers<[1], [0], [0], [1], [0, 0, 1, 1], [], []>} : vector<128x128xbf16>, vector<128x128xbf16>, vector<128x128xf32> -> vector<128x128xf32>
    %c3 = arith.constant 3 : index
    %c0_25 = arith.constant 0 : index
    %c0_26 = arith.constant 0 : index
    %33 = vector.load %arg4[%c3, %c0_25, %c0_26] : memref<9x128x1xf32, #tpu.memory_space<vmem>>, vector<1x128x1xf32>
    %34 = vector.shape_cast %33 : vector<1x128x1xf32> to vector<128x1xf32>
    %35 = vector.broadcast %34 : vector<128x1xf32> to vector<128x128xf32>
    %36 = arith.addf %32, %35 : vector<128x128xf32>
    %cst_27 = arith.constant 0.000000e+00 : f32
    %37 = vector.broadcast %cst_27 : f32 to vector<128x128xf32>
    %38 = arith.maximumf %36, %37 : vector<128x128xf32>
    %c3_28 = arith.constant 3 : index
    %c0_29 = arith.constant 0 : index
    %c0_30 = arith.constant 0 : index
    %39 = vector.load %arg3[%c3_28, %c0_29, %c0_30] : memref<8x128x128xbf16, #tpu.memory_space<vmem>>, vector<1x128x128xbf16>
    %40 = vector.shape_cast %39 : vector<1x128x128xbf16> to vector<128x128xbf16>
    %41 = arith.truncf %38 : vector<128x128xf32> to vector<128x128xbf16>
    %cst_31 = arith.constant dense<0.000000e+00> : vector<128x128xf32>
    %42 = tpu.matmul %40, %41, %cst_31 {dimension_numbers = #tpu.dot_dimension_numbers<[1], [0], [0], [1], [0, 0, 1, 1], [], []>} : vector<128x128xbf16>, vector<128x128xbf16>, vector<128x128xf32> -> vector<128x128xf32>
    %c4 = arith.constant 4 : index
    %c0_32 = arith.constant 0 : index
    %c0_33 = arith.constant 0 : index
    %43 = vector.load %arg4[%c4, %c0_32, %c0_33] : memref<9x128x1xf32, #tpu.memory_space<vmem>>, vector<1x128x1xf32>
    %44 = vector.shape_cast %43 : vector<1x128x1xf32> to vector<128x1xf32>
    %45 = vector.broadcast %44 : vector<128x1xf32> to vector<128x128xf32>
    %46 = arith.addf %42, %45 : vector<128x128xf32>
    %cst_34 = arith.constant 0.000000e+00 : f32
    %47 = vector.broadcast %cst_34 : f32 to vector<128x128xf32>
    %48 = arith.maximumf %46, %47 : vector<128x128xf32>
    %c4_35 = arith.constant 4 : index
    %c0_36 = arith.constant 0 : index
    %c0_37 = arith.constant 0 : index
    %49 = vector.load %arg3[%c4_35, %c0_36, %c0_37] : memref<8x128x128xbf16, #tpu.memory_space<vmem>>, vector<1x128x128xbf16>
    %50 = vector.shape_cast %49 : vector<1x128x128xbf16> to vector<128x128xbf16>
    %51 = arith.truncf %48 : vector<128x128xf32> to vector<128x128xbf16>
    %cst_38 = arith.constant dense<0.000000e+00> : vector<128x128xf32>
    %52 = tpu.matmul %50, %51, %cst_38 {dimension_numbers = #tpu.dot_dimension_numbers<[1], [0], [0], [1], [0, 0, 1, 1], [], []>} : vector<128x128xbf16>, vector<128x128xbf16>, vector<128x128xf32> -> vector<128x128xf32>
    %c5 = arith.constant 5 : index
    %c0_39 = arith.constant 0 : index
    %c0_40 = arith.constant 0 : index
    %53 = vector.load %arg4[%c5, %c0_39, %c0_40] : memref<9x128x1xf32, #tpu.memory_space<vmem>>, vector<1x128x1xf32>
    %54 = vector.shape_cast %53 : vector<1x128x1xf32> to vector<128x1xf32>
    %55 = vector.broadcast %54 : vector<128x1xf32> to vector<128x128xf32>
    %56 = arith.addf %52, %55 : vector<128x128xf32>
    %cst_41 = arith.constant 0.000000e+00 : f32
    %57 = vector.broadcast %cst_41 : f32 to vector<128x128xf32>
    %58 = arith.maximumf %56, %57 : vector<128x128xf32>
    %c5_42 = arith.constant 5 : index
    %c0_43 = arith.constant 0 : index
    %c0_44 = arith.constant 0 : index
    %59 = vector.load %arg3[%c5_42, %c0_43, %c0_44] : memref<8x128x128xbf16, #tpu.memory_space<vmem>>, vector<1x128x128xbf16>
    %60 = vector.shape_cast %59 : vector<1x128x128xbf16> to vector<128x128xbf16>
    %61 = arith.truncf %58 : vector<128x128xf32> to vector<128x128xbf16>
    %cst_45 = arith.constant dense<0.000000e+00> : vector<128x128xf32>
    %62 = tpu.matmul %60, %61, %cst_45 {dimension_numbers = #tpu.dot_dimension_numbers<[1], [0], [0], [1], [0, 0, 1, 1], [], []>} : vector<128x128xbf16>, vector<128x128xbf16>, vector<128x128xf32> -> vector<128x128xf32>
    %c6 = arith.constant 6 : index
    %c0_46 = arith.constant 0 : index
    %c0_47 = arith.constant 0 : index
    %63 = vector.load %arg4[%c6, %c0_46, %c0_47] : memref<9x128x1xf32, #tpu.memory_space<vmem>>, vector<1x128x1xf32>
    %64 = vector.shape_cast %63 : vector<1x128x1xf32> to vector<128x1xf32>
    %65 = vector.broadcast %64 : vector<128x1xf32> to vector<128x128xf32>
    %66 = arith.addf %62, %65 : vector<128x128xf32>
    %cst_48 = arith.constant 0.000000e+00 : f32
    %67 = vector.broadcast %cst_48 : f32 to vector<128x128xf32>
    %68 = arith.maximumf %66, %67 : vector<128x128xf32>
    %c6_49 = arith.constant 6 : index
    %c0_50 = arith.constant 0 : index
    %c0_51 = arith.constant 0 : index
    %69 = vector.load %arg3[%c6_49, %c0_50, %c0_51] : memref<8x128x128xbf16, #tpu.memory_space<vmem>>, vector<1x128x128xbf16>
    %70 = vector.shape_cast %69 : vector<1x128x128xbf16> to vector<128x128xbf16>
    %71 = arith.truncf %68 : vector<128x128xf32> to vector<128x128xbf16>
    %cst_52 = arith.constant dense<0.000000e+00> : vector<128x128xf32>
    %72 = tpu.matmul %70, %71, %cst_52 {dimension_numbers = #tpu.dot_dimension_numbers<[1], [0], [0], [1], [0, 0, 1, 1], [], []>} : vector<128x128xbf16>, vector<128x128xbf16>, vector<128x128xf32> -> vector<128x128xf32>
    %c7 = arith.constant 7 : index
    %c0_53 = arith.constant 0 : index
    %c0_54 = arith.constant 0 : index
    %73 = vector.load %arg4[%c7, %c0_53, %c0_54] : memref<9x128x1xf32, #tpu.memory_space<vmem>>, vector<1x128x1xf32>
    %74 = vector.shape_cast %73 : vector<1x128x1xf32> to vector<128x1xf32>
    %75 = vector.broadcast %74 : vector<128x1xf32> to vector<128x128xf32>
    %76 = arith.addf %72, %75 : vector<128x128xf32>
    %cst_55 = arith.constant 0.000000e+00 : f32
    %77 = vector.broadcast %cst_55 : f32 to vector<128x128xf32>
    %78 = arith.maximumf %76, %77 : vector<128x128xf32>
    %c7_56 = arith.constant 7 : index
    %c0_57 = arith.constant 0 : index
    %c0_58 = arith.constant 0 : index
    %79 = vector.load %arg3[%c7_56, %c0_57, %c0_58] : memref<8x128x128xbf16, #tpu.memory_space<vmem>>, vector<1x128x128xbf16>
    %80 = vector.shape_cast %79 : vector<1x128x128xbf16> to vector<128x128xbf16>
    %81 = arith.truncf %78 : vector<128x128xf32> to vector<128x128xbf16>
    %cst_59 = arith.constant dense<0.000000e+00> : vector<128x128xf32>
    %82 = tpu.matmul %80, %81, %cst_59 {dimension_numbers = #tpu.dot_dimension_numbers<[1], [0], [0], [1], [0, 0, 1, 1], [], []>} : vector<128x128xbf16>, vector<128x128xbf16>, vector<128x128xf32> -> vector<128x128xf32>
    %c8 = arith.constant 8 : index
    %c0_60 = arith.constant 0 : index
    %c0_61 = arith.constant 0 : index
    %83 = vector.load %arg4[%c8, %c0_60, %c0_61] : memref<9x128x1xf32, #tpu.memory_space<vmem>>, vector<1x128x1xf32>
    %84 = vector.shape_cast %83 : vector<1x128x1xf32> to vector<128x1xf32>
    %85 = vector.broadcast %84 : vector<128x1xf32> to vector<128x128xf32>
    %86 = arith.addf %82, %85 : vector<128x128xf32>
    %87 = vector.extract_strided_slice %86 {offsets = [0, 0], sizes = [1, 128], strides = [1, 1]} : vector<128x128xf32> to vector<1x128xf32>
    %c0_62 = arith.constant 0 : index
    %c0_63 = arith.constant 0 : index
    %88 = vector.load %arg5[%c0_62, %c0_63] : memref<1x128xf32, #tpu.memory_space<vmem>>, vector<1x128xf32>
    tpu.vector_store %arg5[%c0_62, %c0_63], %87 {strides = array<i32>} : memref<1x128xf32, #tpu.memory_space<vmem>>, vector<1x128xf32>,
    return
  }
  func.func @transform_0(%arg0: i32) -> (i32, i32) {
    %c0_i32 = arith.constant 0 : i32
    %c0_i32_0 = arith.constant 0 : i32
    return %c0_i32, %arg0 : i32, i32
  }
  func.func @transform_1(%arg0: i32) -> (i32, i32) {
    %c0_i32 = arith.constant 0 : i32
    %c0_i32_0 = arith.constant 0 : i32
    %c0_i32_1 = arith.constant 0 : i32
    return %c0_i32, %c0_i32_0 : i32, i32
  }
  func.func @transform_2(%arg0: i32) -> (i32, i32, i32) {
    %c0_i32 = arith.constant 0 : i32
    %c0_i32_0 = arith.constant 0 : i32
    %c0_i32_1 = arith.constant 0 : i32
    %c0_i32_2 = arith.constant 0 : i32
    return %c0_i32, %c0_i32_0, %c0_i32_1 : i32, i32, i32
  }
  func.func @transform_3(%arg0: i32) -> (i32, i32, i32) {
    %c0_i32 = arith.constant 0 : i32
    %c0_i32_0 = arith.constant 0 : i32
    %c0_i32_1 = arith.constant 0 : i32
    %c0_i32_2 = arith.constant 0 : i32
    return %c0_i32, %c0_i32_0, %c0_i32_1 : i32, i32, i32
  }
  func.func @transform_4(%arg0: i32) -> (i32, i32) {
    %c0_i32 = arith.constant 0 : i32
    %c0_i32_0 = arith.constant 0 : i32
    return %c0_i32, %arg0 : i32, i32
  }
}

</mosaic_0001>

<llo_original>
// kernel: tpu_custom_call.1
$region0: #{tpu_custom_call.1}
  #allocation0 [shape = 'u32[]', space=smem, size = 0x4, offset = 0x4, fixed_abs, tag = 'smem constant byte address 0x4 - core index']
  #allocation1 [shape = 'u32[72,128]{1,0:T(1,128)}', space=vmem, size = 0x9000, scoped, tag = 'internal scratch']
  %s0 = inlined_call_operand.vmem [shape: bf16[16,256], index: 0, kind: input, shape index: {}]
  %s1 = inlined_call_operand.vmem [shape: bf16[128,16], index: 1, kind: input, shape index: {}]
  %s2 = inlined_call_operand.vmem [shape: bf16[8,128,128], index: 2, kind: input, shape index: {}]
  %s3 = inlined_call_operand.vmem [shape: f32[9,128,1], index: 3, kind: input, shape index: {}]
  %s4 = inlined_call_operand.hbm [shape: f32[1,256], index: 4, kind: output, shape index: {}]
  %s5 = sld [smem:[#allocation0]]
  $region90: #{tpu_custom_call.1} parent=0
    _
  %s7 = ssub.s32 1, %s5
  %s8 = scalar_select 0, %s7, %s5
  $region1: #{tpu_custom_call.1} parent=0
    #allocation2 [shape = 'u8[8192]{0}', space=vmem, size = 0x2000, scoped, tag = 'input window, operand 0']
    #allocation3 [shape = 'u8[1024]{0}', space=vmem, size = 0x400, scoped, tag = 'output window, operand 0']
    #allocation4 [shape = 's32[2]{0}', space=sflag, size = 0x8, scoped, tag = 'scoped memory for tpu_custom_call.1']
    %9 = vsyncpa [#allocation4], 0
    %s10 = scalar_lea.sflag [#allocation4], 1
    %11 = vsyncpa %s10, 0
    loop: start=0, step=1, limit=4
    $region2: #{tpu_custom_call.1} parent=1 // loop_pre_header
      _
    $region3: #{tpu_custom_call.1} parent=1 // loop_header
      %s13 = sphi 0, %s17
      %p14 = scmp.ge.s32.totalorder %s13, 4
      %s23 = sphi 0, %s25
      %s26 = sphi 0, %s23
      %s27 = sphi 0, %s26
      %s43 = sphi 0, %s27
      %s47 = sphi 0, %s47
      %s49 = sphi 0, %s47
      %s50 = sphi 0, %s49
      %s64 = sphi 0, %s50
      %s68 = sphi 0, %s68
      %s70 = sphi 0, %s68
      %s71 = sphi 0, %s70
      %s85 = sphi 0, %s71
      %s89 = sphi 0, %s89
      %s91 = sphi 0, %s89
      %s92 = sphi 0, %s91
      %s106 = sphi 0, %s92
      %s112 = sphi 0, %s114
      %s115 = sphi 0, %s112
      %s116 = sphi 0, %s115
      %s132 = sphi 0, %s116
    $region4: #{tpu_custom_call.1} parent=1 // loop_header_branch
      %16 = sbr.rel (%p14) target = $region8
    $region5: #{tpu_custom_call.1} parent=1 // loop_body
      %s18 = ssub.s32 %s13, 1
      %s19 = ssub.s32 %s13, 2
      %s20 = sadd.s32 %s13, 1
      %s21 = ssub.s32 %s13, %s20
      %p22 = scmp.eq.s32.totalorder %s21, 0
      %s24 = sadd.s32 %s23, 1
      %s25 = scalar_select %p22, %s23, %s24
      %p28 = pneg %p22
      %p29 = scmp.eq.s32.totalorder %s13, 1
      %p30 = por %p28, %p29
      %p31 = scmp.ne.s32.totalorder %s23, %s26
      %p32 = scmp.eq.s32.totalorder %s13, 0
      %p33 = por %p31, %p32
      %p34 = scmp.ne.s32.totalorder %s23, %s26
      %p35 = scmp.eq.s32.totalorder %s18, 1
      %p36 = por %p34, %p35
      %p37 = scmp.ne.s32.totalorder %s26, %s27
      %p38 = scmp.eq.s32.totalorder %s18, 0
      %p39 = por %p37, %p38
      %p40 = scmp.ne.s32.totalorder %s26, %s27
      %p41 = scmp.eq.s32.totalorder %s19, 1
      %p42 = por %p40, %p41
      %p44 = scmp.ne.s32.totalorder %s27, %s43
      %p45 = scmp.eq.s32.totalorder %s19, 0
      %p46 = por %p44, %p45
      %s48 = sadd.s32 %s47, 1
      %p51 = scmp.eq.s32.totalorder %s13, 1
      %p52 = scmp.ne.s32.totalorder %s47, %s49
      %p53 = scmp.eq.s32.totalorder %s13, 0
      %p54 = por %p52, %p53
      %p55 = scmp.ne.s32.totalorder %s47, %s49
      %p56 = scmp.eq.s32.totalorder %s18, 1
      %p57 = por %p55, %p56
      %p58 = scmp.ne.s32.totalorder %s49, %s50
      %p59 = scmp.eq.s32.totalorder %s18, 0
      %p60 = por %p58, %p59
      %p61 = scmp.ne.s32.totalorder %s49, %s50
      %p62 = scmp.eq.s32.totalorder %s19, 1
      %p63 = por %p61, %p62
      %p65 = scmp.ne.s32.totalorder %s50, %s64
      %p66 = scmp.eq.s32.totalorder %s19, 0
      %p67 = por %p65, %p66
      %s69 = sadd.s32 %s68, 1
      %p72 = scmp.eq.s32.totalorder %s13, 1
      %p73 = scmp.ne.s32.totalorder %s68, %s70
      %p74 = scmp.eq.s32.totalorder %s13, 0
      %p75 = por %p73, %p74
      %p76 = scmp.ne.s32.totalorder %s68, %s70
      %p77 = scmp.eq.s32.totalorder %s18, 1
      %p78 = por %p76, %p77
      %p79 = scmp.ne.s32.totalorder %s70, %s71
      %p80 = scmp.eq.s32.totalorder %s18, 0
      %p81 = por %p79, %p80
      %p82 = scmp.ne.s32.totalorder %s70, %s71
      %p83 = scmp.eq.s32.totalorder %s19, 1
      %p84 = por %p82, %p83
      %p86 = scmp.ne.s32.totalorder %s71, %s85
      %p87 = scmp.eq.s32.totalorder %s19, 0
      %p88 = por %p86, %p87
      %s90 = sadd.s32 %s89, 1
      %p93 = scmp.eq.s32.totalorder %s13, 1
      %p94 = scmp.ne.s32.totalorder %s89, %s91
      %p95 = scmp.eq.s32.totalorder %s13, 0
      %p96 = por %p94, %p95
      %p97 = scmp.ne.s32.totalorder %s89, %s91
      %p98 = scmp.eq.s32.totalorder %s18, 1
      %p99 = por %p97, %p98
      %p100 = scmp.ne.s32.totalorder %s91, %s92
      %p101 = scmp.eq.s32.totalorder %s18, 0
      %p102 = por %p100, %p101
      %p103 = scmp.ne.s32.totalorder %s91, %s92
      %p104 = scmp.eq.s32.totalorder %s19, 1
      %p105 = por %p103, %p104
      %p107 = scmp.ne.s32.totalorder %s92, %s106
      %p108 = scmp.eq.s32.totalorder %s19, 0
      %p109 = por %p107, %p108
      %s110 = ssub.s32 %s13, %s20
      %p111 = scmp.eq.s32.totalorder %s110, 0
      %s113 = sadd.s32 %s112, 1
      %s114 = scalar_select %p111, %s112, %s113
      %p117 = pneg %p111
      %p118 = scmp.eq.s32.totalorder %s13, 1
      %p119 = por %p117, %p118
      %p120 = scmp.ne.s32.totalorder %s112, %s115
      %p121 = scmp.eq.s32.totalorder %s13, 0
      %p122 = por %p120, %p121
      %p123 = scmp.ne.s32.totalorder %s112, %s115
      %p124 = scmp.eq.s32.totalorder %s18, 1
      %p125 = por %p123, %p124
      %p126 = scmp.ne.s32.totalorder %s115, %s116
      %p127 = scmp.eq.s32.totalorder %s18, 0
      %p128 = por %p126, %p127
      %p129 = scmp.ne.s32.totalorder %s115, %s116
      %p130 = scmp.eq.s32.totalorder %s19, 1
      %p131 = por %p129, %p130
      %p133 = scmp.ne.s32.totalorder %s116, %s132
      %p134 = scmp.eq.s32.totalorder %s19, 0
      %p135 = por %p133, %p134
      %p136 = scmp.le.s32.totalorder 1, %s13
      %p137 = scmp.lt.s32.totalorder %s13, 3
      %p138 = pnand %p136, %p137
      %p139 = pneg %p138
      // Predicated region
      $region9: #{tpu_custom_call.1} parent=5 // pred_check
        _
      $region10: #{tpu_custom_call.1} parent=5 // pred_check_branch
        %141 = sbr.rel (%p138) target = $region12
      $region11: #{tpu_custom_call.1} parent=5 // pred_region
        %s142 = ssub.s32 %s13, 1
        // Predicated region
        $region13: #{tpu_custom_call.1} parent=11 // pred_check
          %p143 = pneg %p60
        $region14: #{tpu_custom_call.1} parent=11 // pred_check_branch
          %145 = sbr.rel (%p143) target = $region16
        $region15: #{tpu_custom_call.1} parent=11 // pred_region
          _
        $region16: #{tpu_custom_call.1} parent=11 // pred_fallthru
          _
        // Predicated region
        $region17: #{tpu_custom_call.1} parent=11 // pred_check
          %p146 = pneg %p81
        $region18: #{tpu_custom_call.1} parent=11 // pred_check_branch
          %148 = sbr.rel (%p146) target = $region20
        $region19: #{tpu_custom_call.1} parent=11 // pred_region
          _
        $region20: #{tpu_custom_call.1} parent=11 // pred_fallthru
          _
        // Predicated region
        $region21: #{tpu_custom_call.1} parent=11 // pred_check
          %p149 = pneg %p102
        $region22: #{tpu_custom_call.1} parent=11 // pred_check_branch
          %151 = sbr.rel (%p149) target = $region24
        $region23: #{tpu_custom_call.1} parent=11 // pred_region
          _
        $region24: #{tpu_custom_call.1} parent=11 // pred_fallthru
          _
      $region12: #{tpu_custom_call.1} parent=5 // pred_fallthru
        _
      %p152 = scmp.lt.s32.totalorder %s13, 2
      // Predicated region
      $region25: #{tpu_custom_call.1} parent=5 // pred_check
        %p153 = pneg %p152
      $region26: #{tpu_custom_call.1} parent=5 // pred_check_branch
        %155 = sbr.rel (%p153) target = $region28
      $region27: #{tpu_custom_call.1} parent=5 // pred_region
        // Predicated region
        $region29: #{tpu_custom_call.1} parent=27 // pred_check
          %p156 = pneg %p33
        $region30: #{tpu_custom_call.1} parent=27 // pred_check_branch
          %158 = sbr.rel (%p156) target = $region32
        $region31: #{tpu_custom_call.1} parent=27 // pred_region
          %s159 = sand.u32 %s23, 1
          %s160 = sand.u32 %s23, 1
          %s161 = smul.addr %s160, 8
          %s162 = scalar_lea.vmem [#allocation2], %s161
          %s163 = smul.addr %s13, 4
          %s164 = scalar_lea.vmem %s0, %s163
          // Predicated region
          $region33: #{tpu_custom_call.1} parent=31 // pred_check
            _
          $region34: #{tpu_custom_call.1} parent=31 // pred_check_branch
            %166 = sbr.rel (0) target = $region36
          $region35: #{tpu_custom_call.1} parent=31 // pred_region
            // Predicated region
            $region37: #{tpu_custom_call.1} parent=35 // pred_check
              _
            $region38: #{tpu_custom_call.1} parent=35 // pred_check_branch
              %168 = sbr.rel target = $region40
            $region39: #{tpu_custom_call.1} parent=35 // pred_region
              // Predicated region
              $region52: #{tpu_custom_call.1} parent=39 // pred_check
                _
              $region53: #{tpu_custom_call.1} parent=39 // pred_check_branch
                %186 = sbr.rel (0) target = $region55
              $region54: #{tpu_custom_call.1} parent=39 // pred_region
                loop: start=0, step=1, limit=1
                $region56: #{tpu_custom_call.1} parent=54 // loop_pre_header
                  _
                $region57: #{tpu_custom_call.1} parent=54 // loop_header
                  %s188 = sphi 0, %s192
                  %p189 = scmp.ge.s32.totalorder %s188, 1
                  %s193 = sphi %s164, %s164
                  %s194 = sphi %s162, %s162
                $region58: #{tpu_custom_call.1} parent=54 // loop_header_branch
                  %191 = sbr.rel (%p189) target = $region62
                $region59: #{tpu_custom_call.1} parent=54 // loop_body
                  _
                $region60: #{tpu_custom_call.1} parent=54 // loop_footer
                  %s192 = sadd.s32 1, %s188
                $region61: #{tpu_custom_call.1} parent=54 // loop_footer_branch
                  %187 = sbr.rel target = $region57
                $region62: #{tpu_custom_call.1} parent=54 // loop_exit
                  _
                %s196 = ssub.s32 16, 1
                loop: start=0, step=1, limit=1
                $region63: #{tpu_custom_call.1} parent=54 // loop_pre_header
                  _
                $region64: #{tpu_custom_call.1} parent=54 // loop_header
                  %s198 = sphi 0, %s202
                  %p199 = scmp.ge.s32.totalorder %s198, 1
                  %s203 = sphi %s164, %s164
                  %s204 = sphi %s162, %s162
                $region65: #{tpu_custom_call.1} parent=54 // loop_header_branch
                  %201 = sbr.rel (%p199) target = $region69
                $region66: #{tpu_custom_call.1} parent=54 // loop_body
                  %v205 = vld [vmem:[%s203] sm:%s196]
                  %206 = vst [vmem:[%s204] sm:%s196] %v205
                  %v207 = vld [vmem:[%s203 + $0x8] sm:%s196]
                  %208 = vst [vmem:[%s204 + $0x4] sm:%s196] %v207
                $region67: #{tpu_custom_call.1} parent=54 // loop_footer
                  %s202 = sadd.s32 1, %s198
                $region68: #{tpu_custom_call.1} parent=54 // loop_footer_branch
                  %197 = sbr.rel target = $region64
                $region69: #{tpu_custom_call.1} parent=54 // loop_exit
                  _
              $region55: #{tpu_custom_call.1} parent=39 // pred_fallthru
                _
            $region40: #{tpu_custom_call.1} parent=35 // pred_fallthru
              _
            // Predicated region
            $region41: #{tpu_custom_call.1} parent=35 // pred_check
              _
            $region42: #{tpu_custom_call.1} parent=35 // pred_check_branch
              %170 = sbr.rel (0) target = $region44
            $region43: #{tpu_custom_call.1} parent=35 // pred_region
              %s172 = ssub.s32 16, 1
              loop: start=0, step=1, limit=1
              $region45: #{tpu_custom_call.1} parent=43 // loop_pre_header
                _
              $region46: #{tpu_custom_call.1} parent=43 // loop_header
                %s174 = sphi 0, %s178
                %p175 = scmp.ge.s32.totalorder %s174, 1
                %s179 = sphi %s164, %s164
                %s180 = sphi %s162, %s162
              $region47: #{tpu_custom_call.1} parent=43 // loop_header_branch
                %177 = sbr.rel (%p175) target = $region51
              $region48: #{tpu_custom_call.1} parent=43 // loop_body
                %v181 = vld [vmem:[%s179] sm:%s172]
                %182 = vst [vmem:[%s180] sm:%s172] %v181
                %v183 = vld [vmem:[%s179 + $0x8] sm:%s172]
                %184 = vst [vmem:[%s180 + $0x4] sm:%s172] %v183
              $region49: #{tpu_custom_call.1} parent=43 // loop_footer
                %s178 = sadd.s32 1, %s174
              $region50: #{tpu_custom_call.1} parent=43 // loop_footer_branch
                %173 = sbr.rel target = $region46
              $region51: #{tpu_custom_call.1} parent=43 // loop_exit
                _
            $region44: #{tpu_custom_call.1} parent=35 // pred_fallthru
              _
          $region36: #{tpu_custom_call.1} parent=31 // pred_fallthru
            _
          %209 = vnop
        $region32: #{tpu_custom_call.1} parent=27 // pred_fallthru
          _
      $region28: #{tpu_custom_call.1} parent=5 // pred_fallthru
        _
      %p210 = scmp.le.s32.totalorder 1, %s13
      %p211 = scmp.lt.s32.totalorder %s13, 3
      %p212 = pnand %p210, %p211
      %p213 = pneg %p212
      // Predicated region
      $region70: #{tpu_custom_call.1} parent=5 // pred_check
        _
      $region71: #{tpu_custom_call.1} parent=5 // pred_check_branch
        %215 = sbr.rel (%p212) target = $region73
      $region72: #{tpu_custom_call.1} parent=5 // pred_region
        %s216 = ssub.s32 %s13, 1
        %s217 = sand.u32 %s26, 1
        %s218 = sand.u32 %s26, 1
        %s219 = smul.addr %s218, 8
        %s220 = scalar_lea.vmem [#allocation2], %s219
        // Predicated region
        $region74: #{tpu_custom_call.1} parent=72 // pred_check
          %p221 = pneg %p39
        $region75: #{tpu_custom_call.1} parent=72 // pred_check_branch
          %223 = sbr.rel (%p221) target = $region77
        $region76: #{tpu_custom_call.1} parent=72 // pred_region
          _
        $region77: #{tpu_custom_call.1} parent=72 // pred_fallthru
          _
        %s224 = sand.u32 %s26, 1
        %s225 = sand.u32 %s26, 1
        %s226 = smul.addr %s225, 8
        %s227 = scalar_lea.vmem [#allocation2], %s226
        %p228 = pneg %p39
        %p229 = pneg %p36
        %p230 = pneg %p60
        %p231 = pneg %p57
        %p232 = pneg %p81
        %p233 = pneg %p78
        %p234 = pneg %p102
        %p235 = pneg %p99
        %p236 = pneg %p128
        %p237 = pneg %p125
        %s238 = sand.u32 %s115, 1
        %s239 = scalar_lea.sflag [#allocation4], %s238
        %s240 = sand.u32 %s115, 1
        %s241 = scalar_lea.vmem [#allocation3], %s240
        %v243 = vld [vmem:[%s1] sm:$0xf]
        %v244 = vld [vmem:[%s1 + $0x4] sm:$0xf]
        %v245 = vld [vmem:[%s1 + $0x8] sm:$0xf]
        %v246 = vld [vmem:[%s1 + $0xc] sm:$0xf]
        %v247 = vld [vmem:[%s1 + $0x10] sm:$0xf]
        %v248 = vld [vmem:[%s1 + $0x14] sm:$0xf]
        %v249 = vld [vmem:[%s1 + $0x18] sm:$0xf]
        %v250 = vld [vmem:[%s1 + $0x1c] sm:$0xf]
        %v251 = vld [vmem:[%s1 + $0x20] sm:$0xf]
        %v252 = vld [vmem:[%s1 + $0x24] sm:$0xf]
        %v253 = vld [vmem:[%s1 + $0x28] sm:$0xf]
        %v254 = vld [vmem:[%s1 + $0x2c] sm:$0xf]
        %v255 = vld [vmem:[%s1 + $0x30] sm:$0xf]
        %v256 = vld [vmem:[%s1 + $0x34] sm:$0xf]
        %v257 = vld [vmem:[%s1 + $0x38] sm:$0xf]
        %v258 = vld [vmem:[%s1 + $0x3c] sm:$0xf]
        %v259 = vld [vmem:[%s220] sm:$0xf]
        %v260 = vld [vmem:[%s220 + $0x4] sm:$0xf]
        %v261 = vld [vmem:[%s3] sm:$0xff]
        %v262 = vld [vmem:[%s3 + $0x8] sm:$0xff]
        %v263 = vld [vmem:[%s3 + $0x10] sm:$0xff]
        %v264 = vld [vmem:[%s3 + $0x18] sm:$0xff]
        %v265 = vld [vmem:[%s3 + $0x20] sm:$0xff]
        %v266 = vld [vmem:[%s3 + $0x28] sm:$0xff]
        %v267 = vld [vmem:[%s3 + $0x30] sm:$0xff]
        %v268 = vld [vmem:[%s3 + $0x38] sm:$0xff]
        %v269 = vld [vmem:[%s3 + $0x40] sm:$0xff]
        %v270 = vld [vmem:[%s3 + $0x48] sm:$0xff]
        %v271 = vld [vmem:[%s3 + $0x50] sm:$0xff]
        %v272 = vld [vmem:[%s3 + $0x58] sm:$0xff]
        %v273 = vld [vmem:[%s3 + $0x60] sm:$0xff]
        %v274 = vld [vmem:[%s3 + $0x68] sm:$0xff]
        %v275 = vld [vmem:[%s3 + $0x70] sm:$0xff]
        %v276 = vld [vmem:[%s3 + $0x78] sm:$0xff]
        %278 = vset.pattern.permute.xlu0 0
        %279 = vperm.xlu0 %278, %v261
        %v280 = vpop.permute.xlu0 %279
        %283 = vset.pattern.permute.xlu0 0
        %284 = vperm.xlu0 %283, %v262
        %v285 = vpop.permute.xlu0 %284
        %288 = vset.pattern.permute.xlu0 0
        %289 = vperm.xlu0 %288, %v263
        %v290 = vpop.permute.xlu0 %289
        %293 = vset.pattern.permute.xlu0 0
        %294 = vperm.xlu0 %293, %v264
        %v295 = vpop.permute.xlu0 %294
        %298 = vset.pattern.permute.xlu0 0
        %299 = vperm.xlu0 %298, %v265
        %v300 = vpop.permute.xlu0 %299
        %303 = vset.pattern.permute.xlu0 0
        %304 = vperm.xlu0 %303, %v266
        %v305 = vpop.permute.xlu0 %304
        %308 = vset.pattern.permute.xlu0 0
        %309 = vperm.xlu0 %308, %v267
        %v310 = vpop.permute.xlu0 %309
        %313 = vset.pattern.permute.xlu0 0
        %314 = vperm.xlu0 %313, %v268
        %v315 = vpop.permute.xlu0 %314
        %318 = vset.pattern.permute.xlu0 0
        %319 = vperm.xlu0 %318, %v269
        %v320 = vpop.permute.xlu0 %319
        %323 = vset.pattern.permute.xlu0 0
        %324 = vperm.xlu0 %323, %v270
        %v325 = vpop.permute.xlu0 %324
        %328 = vset.pattern.permute.xlu0 0
        %329 = vperm.xlu0 %328, %v271
        %v330 = vpop.permute.xlu0 %329
        %333 = vset.pattern.permute.xlu0 0
        %334 = vperm.xlu0 %333, %v272
        %v335 = vpop.permute.xlu0 %334
        %338 = vset.pattern.permute.xlu0 0
        %339 = vperm.xlu0 %338, %v273
        %v340 = vpop.permute.xlu0 %339
        %343 = vset.pattern.permute.xlu0 0
        %344 = vperm.xlu0 %343, %v274
        %v345 = vpop.permute.xlu0 %344
        %348 = vset.pattern.permute.xlu0 0
        %349 = vperm.xlu0 %348, %v275
        %v350 = vpop.permute.xlu0 %349
        %353 = vset.pattern.permute.xlu0 0
        %354 = vperm.xlu0 %353, %v276
        %v355 = vpop.permute.xlu0 %354
        %v373 = vunpack.c.l.b16 %v243
        %v374 = vunpack.c.l.b16 %v244
        %v375 = vunpack.c.l.b16 %v245
        %v376 = vunpack.c.l.b16 %v246
        %v377 = vunpack.c.l.b16 %v247
        %v378 = vunpack.c.l.b16 %v248
        %v379 = vunpack.c.l.b16 %v249
        %v380 = vunpack.c.l.b16 %v250
        %v381 = vunpack.c.l.b16 %v251
        %v382 = vunpack.c.l.b16 %v252
        %v383 = vunpack.c.l.b16 %v253
        %v384 = vunpack.c.l.b16 %v254
        %v385 = vunpack.c.l.b16 %v255
        %v386 = vunpack.c.l.b16 %v256
        %v387 = vunpack.c.l.b16 %v257
        %v388 = vunpack.c.l.b16 %v258
        %v389 = vpack.c.b16 %v374, %v373
        %v390 = vpack.c.b16 %v376, %v375
        %v391 = vpack.c.b16 %v378, %v377
        %v392 = vpack.c.b16 %v380, %v379
        %v393 = vpack.c.b16 %v382, %v381
        %v394 = vpack.c.b16 %v384, %v383
        %v395 = vpack.c.b16 %v386, %v385
        %v396 = vpack.c.b16 %v388, %v387
        %v399 = vunpack.c.l.b16 %v259
        %v400 = vunpack.c.l.b16 %v260
        %v401 = vpack.c.b16 %v400, %v399
        %vm403 = vcmask 130048
        %v405 = vsel %vm403, %v389, 0
        %v408 = vsel %vm403, %v390, 0
        %v411 = vsel %vm403, %v391, 0
        %v414 = vsel %vm403, %v392, 0
        %v417 = vsel %vm403, %v393, 0
        %v420 = vsel %vm403, %v394, 0
        %v423 = vsel %vm403, %v395, 0
        %v426 = vsel %vm403, %v396, 0
        %428 = vmatpush.bf16.msra.mxu0 0
        %429 = vmatpush.bf16.msra.mxu0 0
        %430 = vmatpush.bf16.msra.mxu0 0
        %431 = vmatpush.bf16.msra.mxu0 0
        %432 = vmatpush.bf16.msra.mxu0 0
        %433 = vmatpush.bf16.msra.mxu0 0
        %434 = vmatpush.bf16.msra.mxu0 0
        %435 = vmatpush.bf16.msra.mxu0 %v401
        %436 = vmatmul.bf16.gmra.mxu0 %v405
        %v437 = vpop.f32.mrf.mxu0
        %v438 = vadd.f32 %v280, %v437
        %v439 = vpop.f32.mrf.mxu0
        %v440 = vadd.f32 %v285, %v439
        %441 = vmatmul.bf16.gmra.mxu0 %v408
        %v442 = vpop.f32.mrf.mxu0
        %v443 = vadd.f32 %v290, %v442
        %v444 = vpop.f32.mrf.mxu0
        %v445 = vadd.f32 %v295, %v444
        %446 = vmatmul.bf16.gmra.mxu0 %v411
        %v447 = vpop.f32.mrf.mxu0
        %v448 = vadd.f32 %v300, %v447
        %v449 = vpop.f32.mrf.mxu0
        %v450 = vadd.f32 %v305, %v449
        %451 = vmatmul.bf16.gmra.mxu0 %v414
        %v452 = vpop.f32.mrf.mxu0
        %v453 = vadd.f32 %v310, %v452
        %v454 = vpop.f32.mrf.mxu0
        %v455 = vadd.f32 %v315, %v454
        %456 = vmatmul.bf16.gmra.mxu0 %v417
        %v457 = vpop.f32.mrf.mxu0
        %v458 = vadd.f32 %v320, %v457
        %v459 = vpop.f32.mrf.mxu0
        %v460 = vadd.f32 %v325, %v459
        %461 = vmatmul.bf16.gmra.mxu0 %v420
        %v462 = vpop.f32.mrf.mxu0
        %v463 = vadd.f32 %v330, %v462
        %v464 = vpop.f32.mrf.mxu0
        %v465 = vadd.f32 %v335, %v464
        %466 = vmatmul.bf16.gmra.mxu0 %v423
        %v467 = vpop.f32.mrf.mxu0
        %v468 = vadd.f32 %v340, %v467
        %v469 = vpop.f32.mrf.mxu0
        %v470 = vadd.f32 %v345, %v469
        %471 = vmatmul.bf16.gmra.mxu0 %v426
        %v472 = vpop.f32.mrf.mxu0
        %v473 = vadd.f32 %v350, %v472
        %v474 = vpop.f32.mrf.mxu0
        %v475 = vadd.f32 %v355, %v474
        %476 = vdwg.mxu0
        %v477 = vmax.f32 %v438, 0.0
        %v478 = vmax.f32 %v440, 0.0
        %v479 = vmax.f32 %v443, 0.0
        %v480 = vmax.f32 %v445, 0.0
        %v481 = vmax.f32 %v448, 0.0
        %v482 = vmax.f32 %v450, 0.0
        %v483 = vmax.f32 %v453, 0.0
        %v484 = vmax.f32 %v455, 0.0
        %v485 = vmax.f32 %v458, 0.0
        %v486 = vmax.f32 %v460, 0.0
        %v487 = vmax.f32 %v463, 0.0
        %v488 = vmax.f32 %v465, 0.0
        %v489 = vmax.f32 %v468, 0.0
        %v490 = vmax.f32 %v470, 0.0
        %v491 = vmax.f32 %v473, 0.0
        %v492 = vmax.f32 %v475, 0.0
        %v493 = vld [vmem:[%s2] sm:$0xf]
        %v494 = vld [vmem:[%s2 + $0x4] sm:$0xf]
        %v495 = vld [vmem:[%s2 + $0x8] sm:$0xf]
        %v496 = vld [vmem:[%s2 + $0xc] sm:$0xf]
        %v497 = vld [vmem:[%s2 + $0x10] sm:$0xf]
        %v498 = vld [vmem:[%s2 + $0x14] sm:$0xf]
        %v499 = vld [vmem:[%s2 + $0x18] sm:$0xf]
        %v500 = vld [vmem:[%s2 + $0x1c] sm:$0xf]
        %v501 = vld [vmem:[%s2 + $0x20] sm:$0xf]
        %v502 = vld [vmem:[%s2 + $0x24] sm:$0xf]
        %v503 = vld [vmem:[%s2 + $0x28] sm:$0xf]
        %v504 = vld [vmem:[%s2 + $0x2c] sm:$0xf]
        %v505 = vld [vmem:[%s2 + $0x30] sm:$0xf]
        %v506 = vld [vmem:[%s2 + $0x34] sm:$0xf]
        %v507 = vld [vmem:[%s2 + $0x38] sm:$0xf]
        %v508 = vld [vmem:[%s2 + $0x3c] sm:$0xf]
        %v509 = vpack.c.bf16 %v478, %v477
        %v510 = vpack.c.bf16 %v480, %v479
        %v511 = vpack.c.bf16 %v482, %v481
        %v512 = vpack.c.bf16 %v484, %v483
        %v513 = vpack.c.bf16 %v486, %v485
        %v514 = vpack.c.bf16 %v488, %v487
        %v515 = vpack.c.bf16 %v490, %v489
        %v516 = vpack.c.bf16 %v492, %v491
        %s517 = scalar_lea.vmem %s3, 128
        %v518 = vld [vmem:[%s517] sm:$0xff]
        %v519 = vld [vmem:[%s517 + $0x8] sm:$0xff]
        %v520 = vld [vmem:[%s517 + $0x10] sm:$0xff]
        %v521 = vld [vmem:[%s517 + $0x18] sm:$0xff]
        %v522 = vld [vmem:[%s517 + $0x20] sm:$0xff]
        %v523 = vld [vmem:[%s517 + $0x28] sm:$0xff]
        %v524 = vld [vmem:[%s517 + $0x30] sm:$0xff]
        %v525 = vld [vmem:[%s517 + $0x38] sm:$0xff]
        %v526 = vld [vmem:[%s517 + $0x40] sm:$0xff]
        %v527 = vld [vmem:[%s517 + $0x48] sm:$0xff]
        %v528 = vld [vmem:[%s517 + $0x50] sm:$0xff]
        %v529 = vld [vmem:[%s517 + $0x58] sm:$0xff]
        %v530 = vld [vmem:[%s517 + $0x60] sm:$0xff]
        %v531 = vld [vmem:[%s517 + $0x68] sm:$0xff]
        %v532 = vld [vmem:[%s517 + $0x70] sm:$0xff]
        %v533 = vld [vmem:[%s517 + $0x78] sm:$0xff]
        %535 = vset.pattern.permute.xlu0 0
        %536 = vperm.xlu0 %535, %v518
        %v537 = vpop.permute.xlu0 %536
        %540 = vset.pattern.permute.xlu0 0
        %541 = vperm.xlu0 %540, %v519
        %v542 = vpop.permute.xlu0 %541
        %545 = vset.pattern.permute.xlu0 0
        %546 = vperm.xlu0 %545, %v520
        %v547 = vpop.permute.xlu0 %546
        %550 = vset.pattern.permute.xlu0 0
        %551 = vperm.xlu0 %550, %v521
        %v552 = vpop.permute.xlu0 %551
        %555 = vset.pattern.permute.xlu0 0
        %556 = vperm.xlu0 %555, %v522
        %v557 = vpop.permute.xlu0 %556
        %560 = vset.pattern.permute.xlu0 0
        %561 = vperm.xlu0 %560, %v523
        %v562 = vpop.permute.xlu0 %561
        %565 = vset.pattern.permute.xlu0 0
        %566 = vperm.xlu0 %565, %v524
        %v567 = vpop.permute.xlu0 %566
        %570 = vset.pattern.permute.xlu0 0
        %571 = vperm.xlu0 %570, %v525
        %v572 = vpop.permute.xlu0 %571
        %575 = vset.pattern.permute.xlu0 0
        %576 = vperm.xlu0 %575, %v526
        %v577 = vpop.permute.xlu0 %576
        %580 = vset.pattern.permute.xlu0 0
        %581 = vperm.xlu0 %580, %v527
        %v582 = vpop.permute.xlu0 %581
        %585 = vset.pattern.permute.xlu0 0
        %586 = vperm.xlu0 %585, %v528
        %v587 = vpop.permute.xlu0 %586
        %590 = vset.pattern.permute.xlu0 0
        %591 = vperm.xlu0 %590, %v529
        %v592 = vpop.permute.xlu0 %591
        %595 = vset.pattern.permute.xlu0 0
        %596 = vperm.xlu0 %595, %v530
        %v597 = vpop.permute.xlu0 %596
        %600 = vset.pattern.permute.xlu0 0
        %601 = vperm.xlu0 %600, %v531
        %v602 = vpop.permute.xlu0 %601
        %605 = vset.pattern.permute.xlu0 0
        %606 = vperm.xlu0 %605, %v532
        %v607 = vpop.permute.xlu0 %606
        %610 = vset.pattern.permute.xlu0 0
        %611 = vperm.xlu0 %610, %v533
        %v612 = vpop.permute.xlu0 %611
        %v630 = vunpack.c.l.b16 %v493
        %v631 = vunpack.c.l.b16 %v494
        %v632 = vunpack.c.l.b16 %v495
        %v633 = vunpack.c.l.b16 %v496
        %v634 = vunpack.c.l.b16 %v497
        %v635 = vunpack.c.l.b16 %v498
        %v636 = vunpack.c.l.b16 %v499
        %v637 = vunpack.c.l.b16 %v500
        %v638 = vunpack.c.l.b16 %v501
        %v639 = vunpack.c.l.b16 %v502
        %v640 = vunpack.c.l.b16 %v503
        %v641 = vunpack.c.l.b16 %v504
        %v642 = vunpack.c.l.b16 %v505
        %v643 = vunpack.c.l.b16 %v506
        %v644 = vunpack.c.l.b16 %v507
        %v645 = vunpack.c.l.b16 %v508
        %v646 = vpack.c.b16 %v631, %v630
        %v647 = vpack.c.b16 %v633, %v632
        %v648 = vpack.c.b16 %v635, %v634
        %v649 = vpack.c.b16 %v637, %v636
        %v650 = vpack.c.b16 %v639, %v638
        %v651 = vpack.c.b16 %v641, %v640
        %v652 = vpack.c.b16 %v643, %v642
        %v653 = vpack.c.b16 %v645, %v644
        %662 = vmatpush.bf16.msra.mxu0 %v516
        %663 = vmatpush.bf16.msra.mxu0 %v515
        %664 = vmatpush.bf16.msra.mxu0 %v514
        %665 = vmatpush.bf16.msra.mxu0 %v513
        %666 = vmatpush.bf16.msra.mxu0 %v512
        %667 = vmatpush.bf16.msra.mxu0 %v511
        %668 = vmatpush.bf16.msra.mxu0 %v510
        %669 = vmatpush.bf16.msra.mxu0 %v509
        %670 = vmatmul.bf16.gmra.mxu0 %v646
        %v671 = vpop.f32.mrf.mxu0
        %v672 = vadd.f32 %v537, %v671
        %v673 = vpop.f32.mrf.mxu0
        %v674 = vadd.f32 %v542, %v673
        %675 = vmatmul.bf16.gmra.mxu0 %v647
        %v676 = vpop.f32.mrf.mxu0
        %v677 = vadd.f32 %v547, %v676
        %v678 = vpop.f32.mrf.mxu0
        %v679 = vadd.f32 %v552, %v678
        %680 = vmatmul.bf16.gmra.mxu0 %v648
        %v681 = vpop.f32.mrf.mxu0
        %v682 = vadd.f32 %v557, %v681
        %v683 = vpop.f32.mrf.mxu0
        %v684 = vadd.f32 %v562, %v683
        %685 = vmatmul.bf16.gmra.mxu0 %v649
        %v686 = vpop.f32.mrf.mxu0
        %v687 = vadd.f32 %v567, %v686
        %v688 = vpop.f32.mrf.mxu0
        %v689 = vadd.f32 %v572, %v688
        %690 = vmatmul.bf16.gmra.mxu0 %v650
        %v691 = vpop.f32.mrf.mxu0
        %v692 = vadd.f32 %v577, %v691
        %v693 = vpop.f32.mrf.mxu0
        %v694 = vadd.f32 %v582, %v693
        %695 = vmatmul.bf16.gmra.mxu0 %v651
        %v696 = vpop.f32.mrf.mxu0
        %v697 = vadd.f32 %v587, %v696
        %v698 = vpop.f32.mrf.mxu0
        %v699 = vadd.f32 %v592, %v698
        %700 = vmatmul.bf16.gmra.mxu0 %v652
        %v701 = vpop.f32.mrf.mxu0
        %v702 = vadd.f32 %v597, %v701
        %v703 = vpop.f32.mrf.mxu0
        %v704 = vadd.f32 %v602, %v703
        %705 = vmatmul.bf16.gmra.mxu0 %v653
        %v706 = vpop.f32.mrf.mxu0
        %v707 = vadd.f32 %v607, %v706
        %v708 = vpop.f32.mrf.mxu0
        %v709 = vadd.f32 %v612, %v708
        %710 = vdwg.mxu0
        %v711 = vmax.f32 %v672, 0.0
        %v712 = vmax.f32 %v674, 0.0
        %v713 = vmax.f32 %v677, 0.0
        %v714 = vmax.f32 %v679, 0.0
        %v715 = vmax.f32 %v682, 0.0
        %v716 = vmax.f32 %v684, 0.0
        %v717 = vmax.f32 %v687, 0.0
        %v718 = vmax.f32 %v689, 0.0
        %v719 = vmax.f32 %v692, 0.0
        %v720 = vmax.f32 %v694, 0.0
        %v721 = vmax.f32 %v697, 0.0
        %v722 = vmax.f32 %v699, 0.0
        %v723 = vmax.f32 %v702, 0.0
        %v724 = vmax.f32 %v704, 0.0
        %v725 = vmax.f32 %v707, 0.0
        %v726 = vmax.f32 %v709, 0.0
        %s727 = scalar_lea.vmem %s2, 64
        %v728 = vld [vmem:[%s727] sm:$0xf]
        %v729 = vld [vmem:[%s727 + $0x4] sm:$0xf]
        %v730 = vld [vmem:[%s727 + $0x8] sm:$0xf]
        %v731 = vld [vmem:[%s727 + $0xc] sm:$0xf]
        %v732 = vld [vmem:[%s727 + $0x10] sm:$0xf]
        %v733 = vld [vmem:[%s727 + $0x14] sm:$0xf]
        %v734 = vld [vmem:[%s727 + $0x18] sm:$0xf]
        %v735 = vld [vmem:[%s727 + $0x1c] sm:$0xf]
        %v736 = vld [vmem:[%s727 + $0x20] sm:$0xf]
        %v737 = vld [vmem:[%s727 + $0x24] sm:$0xf]
        %v738 = vld [vmem:[%s727 + $0x28] sm:$0xf]
        %v739 = vld [vmem:[%s727 + $0x2c] sm:$0xf]
        %v740 = vld [vmem:[%s727 + $0x30] sm:$0xf]
        %v741 = vld [vmem:[%s727 + $0x34] sm:$0xf]
        %v742 = vld [vmem:[%s727 + $0x38] sm:$0xf]
        %v743 = vld [vmem:[%s727 + $0x3c] sm:$0xf]
        %v744 = vpack.c.bf16 %v712, %v711
        %v745 = vpack.c.bf16 %v714, %v713
        %v746 = vpack.c.bf16 %v716, %v715
        %v747 = vpack.c.bf16 %v718, %v717
        %v748 = vpack.c.bf16 %v720, %v719
        %v749 = vpack.c.bf16 %v722, %v721
        %v750 = vpack.c.bf16 %v724, %v723
        %v751 = vpack.c.bf16 %v726, %v725
        %s752 = scalar_lea.vmem %s3, 256
        %v753 = vld [vmem:[%s752] sm:$0xff]
        %v754 = vld [vmem:[%s752 + $0x8] sm:$0xff]
        %v755 = vld [vmem:[%s752 + $0x10] sm:$0xff]
        %v756 = vld [vmem:[%s752 + $0x18] sm:$0xff]
        %v757 = vld [vmem:[%s752 + $0x20] sm:$0xff]
        %v758 = vld [vmem:[%s752 + $0x28] sm:$0xff]
        %v759 = vld [vmem:[%s752 + $0x30] sm:$0xff]
        %v760 = vld [vmem:[%s752 + $0x38] sm:$0xff]
        %v761 = vld [vmem:[%s752 + $0x40] sm:$0xff]
        %v762 = vld [vmem:[%s752 + $0x48] sm:$0xff]
        %v763 = vld [vmem:[%s752 + $0x50] sm:$0xff]
        %v764 = vld [vmem:[%s752 + $0x58] sm:$0xff]
        %v765 = vld [vmem:[%s752 + $0x60] sm:$0xff]
        %v766 = vld [vmem:[%s752 + $0x68] sm:$0xff]
        %v767 = vld [vmem:[%s752 + $0x70] sm:$0xff]
        %v768 = vld [vmem:[%s752 + $0x78] sm:$0xff]
        %770 = vset.pattern.permute.xlu0 0
        %771 = vperm.xlu0 %770, %v753
        %v772 = vpop.permute.xlu0 %771
        %775 = vset.pattern.permute.xlu0 0
        %776 = vperm.xlu0 %775, %v754
        %v777 = vpop.permute.xlu0 %776
        %780 = vset.pattern.permute.xlu0 0
        %781 = vperm.xlu0 %780, %v755
        %v782 = vpop.permute.xlu0 %781
        %785 = vset.pattern.permute.xlu0 0
        %786 = vperm.xlu0 %785, %v756
        %v787 = vpop.permute.xlu0 %786
        %790 = vset.pattern.permute.xlu0 0
        %791 = vperm.xlu0 %790, %v757
        %v792 = vpop.permute.xlu0 %791
        %795 = vset.pattern.permute.xlu0 0
        %796 = vperm.xlu0 %795, %v758
        %v797 = vpop.permute.xlu0 %796
        %800 = vset.pattern.permute.xlu0 0
        %801 = vperm.xlu0 %800, %v759
        %v802 = vpop.permute.xlu0 %801
        %805 = vset.pattern.permute.xlu0 0
        %806 = vperm.xlu0 %805, %v760
        %v807 = vpop.permute.xlu0 %806
        %810 = vset.pattern.permute.xlu0 0
        %811 = vperm.xlu0 %810, %v761
        %v812 = vpop.permute.xlu0 %811
        %815 = vset.pattern.permute.xlu0 0
        %816 = vperm.xlu0 %815, %v762
        %v817 = vpop.permute.xlu0 %816
        %820 = vset.pattern.permute.xlu0 0
        %821 = vperm.xlu0 %820, %v763
        %v822 = vpop.permute.xlu0 %821
        %825 = vset.pattern.permute.xlu0 0
        %826 = vperm.xlu0 %825, %v764
        %v827 = vpop.permute.xlu0 %826
        %830 = vset.pattern.permute.xlu0 0
        %831 = vperm.xlu0 %830, %v765
        %v832 = vpop.permute.xlu0 %831
        %835 = vset.pattern.permute.xlu0 0
        %836 = vperm.xlu0 %835, %v766
        %v837 = vpop.permute.xlu0 %836
        %840 = vset.pattern.permute.xlu0 0
        %841 = vperm.xlu0 %840, %v767
        %v842 = vpop.permute.xlu0 %841
        %845 = vset.pattern.permute.xlu0 0
        %846 = vperm.xlu0 %845, %v768
        %v847 = vpop.permute.xlu0 %846
        %v865 = vunpack.c.l.b16 %v728
        %v866 = vunpack.c.l.b16 %v729
        %v867 = vunpack.c.l.b16 %v730
        %v868 = vunpack.c.l.b16 %v731
        %v869 = vunpack.c.l.b16 %v732
        %v870 = vunpack.c.l.b16 %v733
        %v871 = vunpack.c.l.b16 %v734
        %v872 = vunpack.c.l.b16 %v735
        %v873 = vunpack.c.l.b16 %v736
        %v874 = vunpack.c.l.b16 %v737
        %v875 = vunpack.c.l.b16 %v738
        %v876 = vunpack.c.l.b16 %v739
        %v877 = vunpack.c.l.b16 %v740
        %v878 = vunpack.c.l.b16 %v741
        %v879 = vunpack.c.l.b16 %v742
        %v880 = vunpack.c.l.b16 %v743
        %v881 = vpack.c.b16 %v866, %v865
        %v882 = vpack.c.b16 %v868, %v867
        %v883 = vpack.c.b16 %v870, %v869
        %v884 = vpack.c.b16 %v872, %v871
        %v885 = vpack.c.b16 %v874, %v873
        %v886 = vpack.c.b16 %v876, %v875
        %v887 = vpack.c.b16 %v878, %v877
        %v888 = vpack.c.b16 %v880, %v879
        %897 = vmatpush.bf16.msra.mxu0 %v751
        %898 = vmatpush.bf16.msra.mxu0 %v750
        %899 = vmatpush.bf16.msra.mxu0 %v749
        %900 = vmatpush.bf16.msra.mxu0 %v748
        %901 = vmatpush.bf16.msra.mxu0 %v747
        %902 = vmatpush.bf16.msra.mxu0 %v746
        %903 = vmatpush.bf16.msra.mxu0 %v745
        %904 = vmatpush.bf16.msra.mxu0 %v744
        %905 = vmatmul.bf16.gmra.mxu0 %v881
        %v906 = vpop.f32.mrf.mxu0
        %v907 = vadd.f32 %v772, %v906
        %v908 = vpop.f32.mrf.mxu0
        %v909 = vadd.f32 %v777, %v908
        %910 = vmatmul.bf16.gmra.mxu0 %v882
        %v911 = vpop.f32.mrf.mxu0
        %v912 = vadd.f32 %v782, %v911
        %v913 = vpop.f32.mrf.mxu0
        %v914 = vadd.f32 %v787, %v913
        %915 = vmatmul.bf16.gmra.mxu0 %v883
        %v916 = vpop.f32.mrf.mxu0
        %v917 = vadd.f32 %v792, %v916
        %v918 = vpop.f32.mrf.mxu0
        %v919 = vadd.f32 %v797, %v918
        %920 = vmatmul.bf16.gmra.mxu0 %v884
        %v921 = vpop.f32.mrf.mxu0
        %v922 = vadd.f32 %v802, %v921
        %v923 = vpop.f32.mrf.mxu0
        %v924 = vadd.f32 %v807, %v923
        %925 = vmatmul.bf16.gmra.mxu0 %v885
        %v926 = vpop.f32.mrf.mxu0
        %v927 = vadd.f32 %v812, %v926
        %v928 = vpop.f32.mrf.mxu0
        %v929 = vadd.f32 %v817, %v928
        %930 = vmatmul.bf16.gmra.mxu0 %v886
        %v931 = vpop.f32.mrf.mxu0
        %v932 = vadd.f32 %v822, %v931
        %v933 = vpop.f32.mrf.mxu0
        %v934 = vadd.f32 %v827, %v933
        %935 = vmatmul.bf16.gmra.mxu0 %v887
        %v936 = vpop.f32.mrf.mxu0
        %v937 = vadd.f32 %v832, %v936
        %v938 = vpop.f32.mrf.mxu0
        %v939 = vadd.f32 %v837, %v938
        %940 = vmatmul.bf16.gmra.mxu0 %v888
        %v941 = vpop.f32.mrf.mxu0
        %v942 = vadd.f32 %v842, %v941
        %v943 = vpop.f32.mrf.mxu0
        %v944 = vadd.f32 %v847, %v943
        %945 = vdwg.mxu0
        %v946 = vmax.f32 %v907, 0.0
        %v947 = vmax.f32 %v909, 0.0
        %v948 = vmax.f32 %v912, 0.0
        %v949 = vmax.f32 %v914, 0.0
        %v950 = vmax.f32 %v917, 0.0
        %v951 = vmax.f32 %v919, 0.0
        %v952 = vmax.f32 %v922, 0.0
        %v953 = vmax.f32 %v924, 0.0
        %v954 = vmax.f32 %v927, 0.0
        %v955 = vmax.f32 %v929, 0.0
        %v956 = vmax.f32 %v932, 0.0
        %v957 = vmax.f32 %v934, 0.0
        %v958 = vmax.f32 %v937, 0.0
        %v959 = vmax.f32 %v939, 0.0
        %v960 = vmax.f32 %v942, 0.0
        %v961 = vmax.f32 %v944, 0.0
        %s962 = scalar_lea.vmem %s2, 128
        %v963 = vld [vmem:[%s962] sm:$0xf]
        %v964 = vld [vmem:[%s962 + $0x4] sm:$0xf]
        %v965 = vld [vmem:[%s962 + $0x8] sm:$0xf]
        %v966 = vld [vmem:[%s962 + $0xc] sm:$0xf]
        %v967 = vld [vmem:[%s962 + $0x10] sm:$0xf]
        %v968 = vld [vmem:[%s962 + $0x14] sm:$0xf]
        %v969 = vld [vmem:[%s962 + $0x18] sm:$0xf]
        %v970 = vld [vmem:[%s962 + $0x1c] sm:$0xf]
        %v971 = vld [vmem:[%s962 + $0x20] sm:$0xf]
        %v972 = vld [vmem:[%s962 + $0x24] sm:$0xf]
        %v973 = vld [vmem:[%s962 + $0x28] sm:$0xf]
        %v974 = vld [vmem:[%s962 + $0x2c] sm:$0xf]
        %v975 = vld [vmem:[%s962 + $0x30] sm:$0xf]
        %v976 = vld [vmem:[%s962 + $0x34] sm:$0xf]
        %v977 = vld [vmem:[%s962 + $0x38] sm:$0xf]
        %v978 = vld [vmem:[%s962 + $0x3c] sm:$0xf]
        %v979 = vpack.c.bf16 %v947, %v946
        %v980 = vpack.c.bf16 %v949, %v948
        %v981 = vpack.c.bf16 %v951, %v950
        %v982 = vpack.c.bf16 %v953, %v952
        %v983 = vpack.c.bf16 %v955, %v954
        %v984 = vpack.c.bf16 %v957, %v956
        %v985 = vpack.c.bf16 %v959, %v958
        %v986 = vpack.c.bf16 %v961, %v960
        %s987 = scalar_lea.vmem %s3, 384
        %v988 = vld [vmem:[%s987] sm:$0xff]
        %v989 = vld [vmem:[%s987 + $0x8] sm:$0xff]
        %v990 = vld [vmem:[%s987 + $0x10] sm:$0xff]
        %v991 = vld [vmem:[%s987 + $0x18] sm:$0xff]
        %v992 = vld [vmem:[%s987 + $0x20] sm:$0xff]
        %v993 = vld [vmem:[%s987 + $0x28] sm:$0xff]
        %v994 = vld [vmem:[%s987 + $0x30] sm:$0xff]
        %v995 = vld [vmem:[%s987 + $0x38] sm:$0xff]
        %v996 = vld [vmem:[%s987 + $0x40] sm:$0xff]
        %v997 = vld [vmem:[%s987 + $0x48] sm:$0xff]
        %v998 = vld [vmem:[%s987 + $0x50] sm:$0xff]
        %v999 = vld [vmem:[%s987 + $0x58] sm:$0xff]
        %v1000 = vld [vmem:[%s987 + $0x60] sm:$0xff]
        %v1001 = vld [vmem:[%s987 + $0x68] sm:$0xff]
        %v1002 = vld [vmem:[%s987 + $0x70] sm:$0xff]
        %v1003 = vld [vmem:[%s987 + $0x78] sm:$0xff]
        %1005 = vset.pattern.permute.xlu0 0
        %1006 = vperm.xlu0 %1005, %v988
        %v1007 = vpop.permute.xlu0 %1006
        %1010 = vset.pattern.permute.xlu0 0
        %1011 = vperm.xlu0 %1010, %v989
        %v1012 = vpop.permute.xlu0 %1011
        %1015 = vset.pattern.permute.xlu0 0
        %1016 = vperm.xlu0 %1015, %v990
        %v1017 = vpop.permute.xlu0 %1016
        %1020 = vset.pattern.permute.xlu0 0
        %1021 = vperm.xlu0 %1020, %v991
        %v1022 = vpop.permute.xlu0 %1021
        %1025 = vset.pattern.permute.xlu0 0
        %1026 = vperm.xlu0 %1025, %v992
        %v1027 = vpop.permute.xlu0 %1026
        %1030 = vset.pattern.permute.xlu0 0
        %1031 = vperm.xlu0 %1030, %v993
        %v1032 = vpop.permute.xlu0 %1031
        %1035 = vset.pattern.permute.xlu0 0
        %1036 = vperm.xlu0 %1035, %v994
        %v1037 = vpop.permute.xlu0 %1036
        %1040 = vset.pattern.permute.xlu0 0
        %1041 = vperm.xlu0 %1040, %v995
        %v1042 = vpop.permute.xlu0 %1041
        %1045 = vset.pattern.permute.xlu0 0
        %1046 = vperm.xlu0 %1045, %v996
        %v1047 = vpop.permute.xlu0 %1046
        %1050 = vset.pattern.permute.xlu0 0
        %1051 = vperm.xlu0 %1050, %v997
        %v1052 = vpop.permute.xlu0 %1051
        %1055 = vset.pattern.permute.xlu0 0
        %1056 = vperm.xlu0 %1055, %v998
        %v1057 = vpop.permute.xlu0 %1056
        %1060 = vset.pattern.permute.xlu0 0
        %1061 = vperm.xlu0 %1060, %v999
        %v1062 = vpop.permute.xlu0 %1061
        %1065 = vset.pattern.permute.xlu0 0
        %1066 = vperm.xlu0 %1065, %v1000
        %v1067 = vpop.permute.xlu0 %1066
        %1070 = vset.pattern.permute.xlu0 0
        %1071 = vperm.xlu0 %1070, %v1001
        %v1072 = vpop.permute.xlu0 %1071
        %1075 = vset.pattern.permute.xlu0 0
        %1076 = vperm.xlu0 %1075, %v1002
        %v1077 = vpop.permute.xlu0 %1076
        %1080 = vset.pattern.permute.xlu0 0
        %1081 = vperm.xlu0 %1080, %v1003
        %v1082 = vpop.permute.xlu0 %1081
        %v1100 = vunpack.c.l.b16 %v963
        %v1101 = vunpack.c.l.b16 %v964
        %v1102 = vunpack.c.l.b16 %v965
        %v1103 = vunpack.c.l.b16 %v966
        %v1104 = vunpack.c.l.b16 %v967
        %v1105 = vunpack.c.l.b16 %v968
        %v1106 = vunpack.c.l.b16 %v969
        %v1107 = vunpack.c.l.b16 %v970
        %v1108 = vunpack.c.l.b16 %v971
        %v1109 = vunpack.c.l.b16 %v972
        %v1110 = vunpack.c.l.b16 %v973
        %v1111 = vunpack.c.l.b16 %v974
        %v1112 = vunpack.c.l.b16 %v975
        %v1113 = vunpack.c.l.b16 %v976
        %v1114 = vunpack.c.l.b16 %v977
        %v1115 = vunpack.c.l.b16 %v978
        %v1116 = vpack.c.b16 %v1101, %v1100
        %v1117 = vpack.c.b16 %v1103, %v1102
        %v1118 = vpack.c.b16 %v1105, %v1104
        %v1119 = vpack.c.b16 %v1107, %v1106
        %v1120 = vpack.c.b16 %v1109, %v1108
        %v1121 = vpack.c.b16 %v1111, %v1110
        %v1122 = vpack.c.b16 %v1113, %v1112
        %v1123 = vpack.c.b16 %v1115, %v1114
        %1132 = vmatpush.bf16.msra.mxu0 %v986
        %1133 = vmatpush.bf16.msra.mxu0 %v985
        %1134 = vmatpush.bf16.msra.mxu0 %v984
        %1135 = vmatpush.bf16.msra.mxu0 %v983
        %1136 = vmatpush.bf16.msra.mxu0 %v982
        %1137 = vmatpush.bf16.msra.mxu0 %v981
        %1138 = vmatpush.bf16.msra.mxu0 %v980
        %1139 = vmatpush.bf16.msra.mxu0 %v979
        %1140 = vmatmul.bf16.gmra.mxu0 %v1116
        %v1141 = vpop.f32.mrf.mxu0
        %v1142 = vadd.f32 %v1007, %v1141
        %v1143 = vpop.f32.mrf.mxu0
        %v1144 = vadd.f32 %v1012, %v1143
        %1145 = vmatmul.bf16.gmra.mxu0 %v1117
        %v1146 = vpop.f32.mrf.mxu0
        %v1147 = vadd.f32 %v1017, %v1146
        %v1148 = vpop.f32.mrf.mxu0
        %v1149 = vadd.f32 %v1022, %v1148
        %1150 = vmatmul.bf16.gmra.mxu0 %v1118
        %v1151 = vpop.f32.mrf.mxu0
        %v1152 = vadd.f32 %v1027, %v1151
        %v1153 = vpop.f32.mrf.mxu0
        %v1154 = vadd.f32 %v1032, %v1153
        %1155 = vmatmul.bf16.gmra.mxu0 %v1119
        %v1156 = vpop.f32.mrf.mxu0
        %v1157 = vadd.f32 %v1037, %v1156
        %v1158 = vpop.f32.mrf.mxu0
        %v1159 = vadd.f32 %v1042, %v1158
        %1160 = vmatmul.bf16.gmra.mxu0 %v1120
        %v1161 = vpop.f32.mrf.mxu0
        %v1162 = vadd.f32 %v1047, %v1161
        %v1163 = vpop.f32.mrf.mxu0
        %v1164 = vadd.f32 %v1052, %v1163
        %1165 = vmatmul.bf16.gmra.mxu0 %v1121
        %v1166 = vpop.f32.mrf.mxu0
        %v1167 = vadd.f32 %v1057, %v1166
        %v1168 = vpop.f32.mrf.mxu0
        %v1169 = vadd.f32 %v1062, %v1168
        %1170 = vmatmul.bf16.gmra.mxu0 %v1122
        %v1171 = vpop.f32.mrf.mxu0
        %v1172 = vadd.f32 %v1067, %v1171
        %v1173 = vpop.f32.mrf.mxu0
        %v1174 = vadd.f32 %v1072, %v1173
        %1175 = vmatmul.bf16.gmra.mxu0 %v1123
        %v1176 = vpop.f32.mrf.mxu0
        %v1177 = vadd.f32 %v1077, %v1176
        %v1178 = vpop.f32.mrf.mxu0
        %v1179 = vadd.f32 %v1082, %v1178
        %1180 = vdwg.mxu0
        %v1181 = vmax.f32 %v1142, 0.0
        %v1182 = vmax.f32 %v1144, 0.0
        %v1183 = vmax.f32 %v1147, 0.0
        %v1184 = vmax.f32 %v1149, 0.0
        %v1185 = vmax.f32 %v1152, 0.0
        %v1186 = vmax.f32 %v1154, 0.0
        %v1187 = vmax.f32 %v1157, 0.0
        %v1188 = vmax.f32 %v1159, 0.0
        %v1189 = vmax.f32 %v1162, 0.0
        %v1190 = vmax.f32 %v1164, 0.0
        %v1191 = vmax.f32 %v1167, 0.0
        %v1192 = vmax.f32 %v1169, 0.0
        %v1193 = vmax.f32 %v1172, 0.0
        %v1194 = vmax.f32 %v1174, 0.0
        %v1195 = vmax.f32 %v1177, 0.0
        %v1196 = vmax.f32 %v1179, 0.0
        %s1197 = scalar_lea.vmem %s2, 192
        %v1198 = vld [vmem:[%s1197] sm:$0xf]
        %v1199 = vld [vmem:[%s1197 + $0x4] sm:$0xf]
        %v1200 = vld [vmem:[%s1197 + $0x8] sm:$0xf]
        %v1201 = vld [vmem:[%s1197 + $0xc] sm:$0xf]
        %v1202 = vld [vmem:[%s1197 + $0x10] sm:$0xf]
        %v1203 = vld [vmem:[%s1197 + $0x14] sm:$0xf]
        %v1204 = vld [vmem:[%s1197 + $0x18] sm:$0xf]
        %v1205 = vld [vmem:[%s1197 + $0x1c] sm:$0xf]
        %v1206 = vld [vmem:[%s1197 + $0x20] sm:$0xf]
        %v1207 = vld [vmem:[%s1197 + $0x24] sm:$0xf]
        %v1208 = vld [vmem:[%s1197 + $0x28] sm:$0xf]
        %v1209 = vld [vmem:[%s1197 + $0x2c] sm:$0xf]
        %v1210 = vld [vmem:[%s1197 + $0x30] sm:$0xf]
        %v1211 = vld [vmem:[%s1197 + $0x34] sm:$0xf]
        %v1212 = vld [vmem:[%s1197 + $0x38] sm:$0xf]
        %v1213 = vld [vmem:[%s1197 + $0x3c] sm:$0xf]
        %v1214 = vpack.c.bf16 %v1182, %v1181
        %v1215 = vpack.c.bf16 %v1184, %v1183
        %v1216 = vpack.c.bf16 %v1186, %v1185
        %v1217 = vpack.c.bf16 %v1188, %v1187
        %v1218 = vpack.c.bf16 %v1190, %v1189
        %v1219 = vpack.c.bf16 %v1192, %v1191
        %v1220 = vpack.c.bf16 %v1194, %v1193
        %v1221 = vpack.c.bf16 %v1196, %v1195
        %s1222 = scalar_lea.vmem %s3, 512
        %v1223 = vld [vmem:[%s1222] sm:$0xff]
        %v1224 = vld [vmem:[%s1222 + $0x8] sm:$0xff]
        %v1225 = vld [vmem:[%s1222 + $0x10] sm:$0xff]
        %v1226 = vld [vmem:[%s1222 + $0x18] sm:$0xff]
        %v1227 = vld [vmem:[%s1222 + $0x20] sm:$0xff]
        %v1228 = vld [vmem:[%s1222 + $0x28] sm:$0xff]
        %v1229 = vld [vmem:[%s1222 + $0x30] sm:$0xff]
        %v1230 = vld [vmem:[%s1222 + $0x38] sm:$0xff]
        %v1231 = vld [vmem:[%s1222 + $0x40] sm:$0xff]
        %v1232 = vld [vmem:[%s1222 + $0x48] sm:$0xff]
        %v1233 = vld [vmem:[%s1222 + $0x50] sm:$0xff]
        %v1234 = vld [vmem:[%s1222 + $0x58] sm:$0xff]
        %v1235 = vld [vmem:[%s1222 + $0x60] sm:$0xff]
        %v1236 = vld [vmem:[%s1222 + $0x68] sm:$0xff]
        %v1237 = vld [vmem:[%s1222 + $0x70] sm:$0xff]
        %v1238 = vld [vmem:[%s1222 + $0x78] sm:$0xff]
        %1240 = vset.pattern.permute.xlu0 0
        %1241 = vperm.xlu0 %1240, %v1223
        %v1242 = vpop.permute.xlu0 %1241
        %1245 = vset.pattern.permute.xlu0 0
        %1246 = vperm.xlu0 %1245, %v1224
        %v1247 = vpop.permute.xlu0 %1246
        %1250 = vset.pattern.permute.xlu0 0
        %1251 = vperm.xlu0 %1250, %v1225
        %v1252 = vpop.permute.xlu0 %1251
        %1255 = vset.pattern.permute.xlu0 0
        %1256 = vperm.xlu0 %1255, %v1226
        %v1257 = vpop.permute.xlu0 %1256
        %1260 = vset.pattern.permute.xlu0 0
        %1261 = vperm.xlu0 %1260, %v1227
        %v1262 = vpop.permute.xlu0 %1261
        %1265 = vset.pattern.permute.xlu0 0
        %1266 = vperm.xlu0 %1265, %v1228
        %v1267 = vpop.permute.xlu0 %1266
        %1270 = vset.pattern.permute.xlu0 0
        %1271 = vperm.xlu0 %1270, %v1229
        %v1272 = vpop.permute.xlu0 %1271
        %1275 = vset.pattern.permute.xlu0 0
        %1276 = vperm.xlu0 %1275, %v1230
        %v1277 = vpop.permute.xlu0 %1276
        %1280 = vset.pattern.permute.xlu0 0
        %1281 = vperm.xlu0 %1280, %v1231
        %v1282 = vpop.permute.xlu0 %1281
        %1285 = vset.pattern.permute.xlu0 0
        %1286 = vperm.xlu0 %1285, %v1232
        %v1287 = vpop.permute.xlu0 %1286
        %1290 = vset.pattern.permute.xlu0 0
        %1291 = vperm.xlu0 %1290, %v1233
        %v1292 = vpop.permute.xlu0 %1291
        %1295 = vset.pattern.permute.xlu0 0
        %1296 = vperm.xlu0 %1295, %v1234
        %v1297 = vpop.permute.xlu0 %1296
        %1300 = vset.pattern.permute.xlu0 0
        %1301 = vperm.xlu0 %1300, %v1235
        %v1302 = vpop.permute.xlu0 %1301
        %1305 = vset.pattern.permute.xlu0 0
        %1306 = vperm.xlu0 %1305, %v1236
        %v1307 = vpop.permute.xlu0 %1306
        %1310 = vset.pattern.permute.xlu0 0
        %1311 = vperm.xlu0 %1310, %v1237
        %v1312 = vpop.permute.xlu0 %1311
        %1315 = vset.pattern.permute.xlu0 0
        %1316 = vperm.xlu0 %1315, %v1238
        %v1317 = vpop.permute.xlu0 %1316
        %v1335 = vunpack.c.l.b16 %v1198
        %v1336 = vunpack.c.l.b16 %v1199
        %v1337 = vunpack.c.l.b16 %v1200
        %v1338 = vunpack.c.l.b16 %v1201
        %v1339 = vunpack.c.l.b16 %v1202
        %v1340 = vunpack.c.l.b16 %v1203
        %v1341 = vunpack.c.l.b16 %v1204
        %v1342 = vunpack.c.l.b16 %v1205
        %v1343 = vunpack.c.l.b16 %v1206
        %v1344 = vunpack.c.l.b16 %v1207
        %v1345 = vunpack.c.l.b16 %v1208
        %v1346 = vunpack.c.l.b16 %v1209
        %v1347 = vunpack.c.l.b16 %v1210
        %v1348 = vunpack.c.l.b16 %v1211
        %v1349 = vunpack.c.l.b16 %v1212
        %v1350 = vunpack.c.l.b16 %v1213
        %v1351 = vpack.c.b16 %v1336, %v1335
        %v1352 = vpack.c.b16 %v1338, %v1337
        %v1353 = vpack.c.b16 %v1340, %v1339
        %v1354 = vpack.c.b16 %v1342, %v1341
        %v1355 = vpack.c.b16 %v1344, %v1343
        %v1356 = vpack.c.b16 %v1346, %v1345
        %v1357 = vpack.c.b16 %v1348, %v1347
        %v1358 = vpack.c.b16 %v1350, %v1349
        %1367 = vmatpush.bf16.msra.mxu0 %v1221
        %1368 = vmatpush.bf16.msra.mxu0 %v1220
        %1369 = vmatpush.bf16.msra.mxu0 %v1219
        %1370 = vmatpush.bf16.msra.mxu0 %v1218
        %1371 = vmatpush.bf16.msra.mxu0 %v1217
        %1372 = vmatpush.bf16.msra.mxu0 %v1216
        %1373 = vmatpush.bf16.msra.mxu0 %v1215
        %1374 = vmatpush.bf16.msra.mxu0 %v1214
        %1375 = vmatmul.bf16.gmra.mxu0 %v1351
        %v1376 = vpop.f32.mrf.mxu0
        %v1377 = vadd.f32 %v1242, %v1376
        %v1378 = vpop.f32.mrf.mxu0
        %v1379 = vadd.f32 %v1247, %v1378
        %1380 = vmatmul.bf16.gmra.mxu0 %v1352
        %v1381 = vpop.f32.mrf.mxu0
        %v1382 = vadd.f32 %v1252, %v1381
        %v1383 = vpop.f32.mrf.mxu0
        %v1384 = vadd.f32 %v1257, %v1383
        %1385 = vmatmul.bf16.gmra.mxu0 %v1353
        %v1386 = vpop.f32.mrf.mxu0
        %v1387 = vadd.f32 %v1262, %v1386
        %v1388 = vpop.f32.mrf.mxu0
        %v1389 = vadd.f32 %v1267, %v1388
        %1390 = vmatmul.bf16.gmra.mxu0 %v1354
        %v1391 = vpop.f32.mrf.mxu0
        %v1392 = vadd.f32 %v1272, %v1391
        %v1393 = vpop.f32.mrf.mxu0
        %v1394 = vadd.f32 %v1277, %v1393
        %1395 = vmatmul.bf16.gmra.mxu0 %v1355
        %v1396 = vpop.f32.mrf.mxu0
        %v1397 = vadd.f32 %v1282, %v1396
        %v1398 = vpop.f32.mrf.mxu0
        %v1399 = vadd.f32 %v1287, %v1398
        %1400 = vmatmul.bf16.gmra.mxu0 %v1356
        %v1401 = vpop.f32.mrf.mxu0
        %v1402 = vadd.f32 %v1292, %v1401
        %v1403 = vpop.f32.mrf.mxu0
        %v1404 = vadd.f32 %v1297, %v1403
        %1405 = vmatmul.bf16.gmra.mxu0 %v1357
        %v1406 = vpop.f32.mrf.mxu0
        %v1407 = vadd.f32 %v1302, %v1406
        %v1408 = vpop.f32.mrf.mxu0
        %v1409 = vadd.f32 %v1307, %v1408
        %1410 = vmatmul.bf16.gmra.mxu0 %v1358
        %v1411 = vpop.f32.mrf.mxu0
        %v1412 = vadd.f32 %v1312, %v1411
        %v1413 = vpop.f32.mrf.mxu0
        %v1414 = vadd.f32 %v1317, %v1413
        %1415 = vdwg.mxu0
        %v1416 = vmax.f32 %v1377, 0.0
        %v1417 = vmax.f32 %v1379, 0.0
        %v1418 = vmax.f32 %v1382, 0.0
        %v1419 = vmax.f32 %v1384, 0.0
        %v1420 = vmax.f32 %v1387, 0.0
        %v1421 = vmax.f32 %v1389, 0.0
        %v1422 = vmax.f32 %v1392, 0.0
        %v1423 = vmax.f32 %v1394, 0.0
        %v1424 = vmax.f32 %v1397, 0.0
        %v1425 = vmax.f32 %v1399, 0.0
        %v1426 = vmax.f32 %v1402, 0.0
        %v1427 = vmax.f32 %v1404, 0.0
        %v1428 = vmax.f32 %v1407, 0.0
        %v1429 = vmax.f32 %v1409, 0.0
        %v1430 = vmax.f32 %v1412, 0.0
        %v1431 = vmax.f32 %v1414, 0.0
        %s1432 = scalar_lea.vmem %s2, 256
        %v1433 = vld [vmem:[%s1432] sm:$0xf]
        %v1434 = vld [vmem:[%s1432 + $0x4] sm:$0xf]
        %v1435 = vld [vmem:[%s1432 + $0x8] sm:$0xf]
        %v1436 = vld [vmem:[%s1432 + $0xc] sm:$0xf]
        %v1437 = vld [vmem:[%s1432 + $0x10] sm:$0xf]
        %v1438 = vld [vmem:[%s1432 + $0x14] sm:$0xf]
        %v1439 = vld [vmem:[%s1432 + $0x18] sm:$0xf]
        %v1440 = vld [vmem:[%s1432 + $0x1c] sm:$0xf]
        %v1441 = vld [vmem:[%s1432 + $0x20] sm:$0xf]
        %v1442 = vld [vmem:[%s1432 + $0x24] sm:$0xf]
        %v1443 = vld [vmem:[%s1432 + $0x28] sm:$0xf]
        %v1444 = vld [vmem:[%s1432 + $0x2c] sm:$0xf]
        %v1445 = vld [vmem:[%s1432 + $0x30] sm:$0xf]
        %v1446 = vld [vmem:[%s1432 + $0x34] sm:$0xf]
        %v1447 = vld [vmem:[%s1432 + $0x38] sm:$0xf]
        %v1448 = vld [vmem:[%s1432 + $0x3c] sm:$0xf]
        %v1449 = vpack.c.bf16 %v1417, %v1416
        %v1450 = vpack.c.bf16 %v1419, %v1418
        %v1451 = vpack.c.bf16 %v1421, %v1420
        %v1452 = vpack.c.bf16 %v1423, %v1422
        %v1453 = vpack.c.bf16 %v1425, %v1424
        %v1454 = vpack.c.bf16 %v1427, %v1426
        %v1455 = vpack.c.bf16 %v1429, %v1428
        %v1456 = vpack.c.bf16 %v1431, %v1430
        %s1457 = scalar_lea.vmem %s3, 640
        %v1458 = vld [vmem:[%s1457] sm:$0xff]
        %v1459 = vld [vmem:[%s1457 + $0x8] sm:$0xff]
        %v1460 = vld [vmem:[%s1457 + $0x10] sm:$0xff]
        %v1461 = vld [vmem:[%s1457 + $0x18] sm:$0xff]
        %v1462 = vld [vmem:[%s1457 + $0x20] sm:$0xff]
        %v1463 = vld [vmem:[%s1457 + $0x28] sm:$0xff]
        %v1464 = vld [vmem:[%s1457 + $0x30] sm:$0xff]
        %v1465 = vld [vmem:[%s1457 + $0x38] sm:$0xff]
        %v1466 = vld [vmem:[%s1457 + $0x40] sm:$0xff]
        %v1467 = vld [vmem:[%s1457 + $0x48] sm:$0xff]
        %v1468 = vld [vmem:[%s1457 + $0x50] sm:$0xff]
        %v1469 = vld [vmem:[%s1457 + $0x58] sm:$0xff]
        %v1470 = vld [vmem:[%s1457 + $0x60] sm:$0xff]
        %v1471 = vld [vmem:[%s1457 + $0x68] sm:$0xff]
        %v1472 = vld [vmem:[%s1457 + $0x70] sm:$0xff]
        %v1473 = vld [vmem:[%s1457 + $0x78] sm:$0xff]
        %1475 = vset.pattern.permute.xlu0 0
        %1476 = vperm.xlu0 %1475, %v1458
        %v1477 = vpop.permute.xlu0 %1476
        %1480 = vset.pattern.permute.xlu0 0
        %1481 = vperm.xlu0 %1480, %v1459
        %v1482 = vpop.permute.xlu0 %1481
        %1485 = vset.pattern.permute.xlu0 0
        %1486 = vperm.xlu0 %1485, %v1460
        %v1487 = vpop.permute.xlu0 %1486
        %1490 = vset.pattern.permute.xlu0 0
        %1491 = vperm.xlu0 %1490, %v1461
        %v1492 = vpop.permute.xlu0 %1491
        %1495 = vset.pattern.permute.xlu0 0
        %1496 = vperm.xlu0 %1495, %v1462
        %v1497 = vpop.permute.xlu0 %1496
        %1500 = vset.pattern.permute.xlu0 0
        %1501 = vperm.xlu0 %1500, %v1463
        %v1502 = vpop.permute.xlu0 %1501
        %1505 = vset.pattern.permute.xlu0 0
        %1506 = vperm.xlu0 %1505, %v1464
        %v1507 = vpop.permute.xlu0 %1506
        %1510 = vset.pattern.permute.xlu0 0
        %1511 = vperm.xlu0 %1510, %v1465
        %v1512 = vpop.permute.xlu0 %1511
        %1515 = vset.pattern.permute.xlu0 0
        %1516 = vperm.xlu0 %1515, %v1466
        %v1517 = vpop.permute.xlu0 %1516
        %1520 = vset.pattern.permute.xlu0 0
        %1521 = vperm.xlu0 %1520, %v1467
        %v1522 = vpop.permute.xlu0 %1521
        %1525 = vset.pattern.permute.xlu0 0
        %1526 = vperm.xlu0 %1525, %v1468
        %v1527 = vpop.permute.xlu0 %1526
        %1530 = vset.pattern.permute.xlu0 0
        %1531 = vperm.xlu0 %1530, %v1469
        %v1532 = vpop.permute.xlu0 %1531
        %1535 = vset.pattern.permute.xlu0 0
        %1536 = vperm.xlu0 %1535, %v1470
        %v1537 = vpop.permute.xlu0 %1536
        %1540 = vset.pattern.permute.xlu0 0
        %1541 = vperm.xlu0 %1540, %v1471
        %v1542 = vpop.permute.xlu0 %1541
        %1545 = vset.pattern.permute.xlu0 0
        %1546 = vperm.xlu0 %1545, %v1472
        %v1547 = vpop.permute.xlu0 %1546
        %1550 = vset.pattern.permute.xlu0 0
        %1551 = vperm.xlu0 %1550, %v1473
        %v1552 = vpop.permute.xlu0 %1551
        %v1570 = vunpack.c.l.b16 %v1433
        %v1571 = vunpack.c.l.b16 %v1434
        %v1572 = vunpack.c.l.b16 %v1435
        %v1573 = vunpack.c.l.b16 %v1436
        %v1574 = vunpack.c.l.b16 %v1437
        %v1575 = vunpack.c.l.b16 %v1438
        %v1576 = vunpack.c.l.b16 %v1439
        %v1577 = vunpack.c.l.b16 %v1440
        %v1578 = vunpack.c.l.b16 %v1441
        %v1579 = vunpack.c.l.b16 %v1442
        %v1580 = vunpack.c.l.b16 %v1443
        %v1581 = vunpack.c.l.b16 %v1444
        %v1582 = vunpack.c.l.b16 %v1445
        %v1583 = vunpack.c.l.b16 %v1446
        %v1584 = vunpack.c.l.b16 %v1447
        %v1585 = vunpack.c.l.b16 %v1448
        %v1586 = vpack.c.b16 %v1571, %v1570
        %v1587 = vpack.c.b16 %v1573, %v1572
        %v1588 = vpack.c.b16 %v1575, %v1574
        %v1589 = vpack.c.b16 %v1577, %v1576
        %v1590 = vpack.c.b16 %v1579, %v1578
        %v1591 = vpack.c.b16 %v1581, %v1580
        %v1592 = vpack.c.b16 %v1583, %v1582
        %v1593 = vpack.c.b16 %v1585, %v1584
        %1602 = vmatpush.bf16.msra.mxu0 %v1456
        %1603 = vmatpush.bf16.msra.mxu0 %v1455
        %1604 = vmatpush.bf16.msra.mxu0 %v1454
        %1605 = vmatpush.bf16.msra.mxu0 %v1453
        %1606 = vmatpush.bf16.msra.mxu0 %v1452
        %1607 = vmatpush.bf16.msra.mxu0 %v1451
        %1608 = vmatpush.bf16.msra.mxu0 %v1450
        %1609 = vmatpush.bf16.msra.mxu0 %v1449
        %1610 = vmatmul.bf16.gmra.mxu0 %v1586
        %v1611 = vpop.f32.mrf.mxu0
        %v1612 = vadd.f32 %v1477, %v1611
        %v1613 = vpop.f32.mrf.mxu0
        %v1614 = vadd.f32 %v1482, %v1613
        %1615 = vmatmul.bf16.gmra.mxu0 %v1587
        %v1616 = vpop.f32.mrf.mxu0
        %v1617 = vadd.f32 %v1487, %v1616
        %v1618 = vpop.f32.mrf.mxu0
        %v1619 = vadd.f32 %v1492, %v1618
        %1620 = vmatmul.bf16.gmra.mxu0 %v1588
        %v1621 = vpop.f32.mrf.mxu0
        %v1622 = vadd.f32 %v1497, %v1621
        %v1623 = vpop.f32.mrf.mxu0
        %v1624 = vadd.f32 %v1502, %v1623
        %1625 = vmatmul.bf16.gmra.mxu0 %v1589
        %v1626 = vpop.f32.mrf.mxu0
        %v1627 = vadd.f32 %v1507, %v1626
        %v1628 = vpop.f32.mrf.mxu0
        %v1629 = vadd.f32 %v1512, %v1628
        %1630 = vmatmul.bf16.gmra.mxu0 %v1590
        %v1631 = vpop.f32.mrf.mxu0
        %v1632 = vadd.f32 %v1517, %v1631
        %v1633 = vpop.f32.mrf.mxu0
        %v1634 = vadd.f32 %v1522, %v1633
        %1635 = vmatmul.bf16.gmra.mxu0 %v1591
        %v1636 = vpop.f32.mrf.mxu0
        %v1637 = vadd.f32 %v1527, %v1636
        %v1638 = vpop.f32.mrf.mxu0
        %v1639 = vadd.f32 %v1532, %v1638
        %1640 = vmatmul.bf16.gmra.mxu0 %v1592
        %v1641 = vpop.f32.mrf.mxu0
        %v1642 = vadd.f32 %v1537, %v1641
        %v1643 = vpop.f32.mrf.mxu0
        %v1644 = vadd.f32 %v1542, %v1643
        %1645 = vmatmul.bf16.gmra.mxu0 %v1593
        %v1646 = vpop.f32.mrf.mxu0
        %v1647 = vadd.f32 %v1547, %v1646
        %v1648 = vpop.f32.mrf.mxu0
        %v1649 = vadd.f32 %v1552, %v1648
        %1650 = vdwg.mxu0
        %v1651 = vmax.f32 %v1612, 0.0
        %v1652 = vmax.f32 %v1614, 0.0
        %v1653 = vmax.f32 %v1617, 0.0
        %v1654 = vmax.f32 %v1619, 0.0
        %v1655 = vmax.f32 %v1622, 0.0
        %v1656 = vmax.f32 %v1624, 0.0
        %v1657 = vmax.f32 %v1627, 0.0
        %v1658 = vmax.f32 %v1629, 0.0
        %v1659 = vmax.f32 %v1632, 0.0
        %v1660 = vmax.f32 %v1634, 0.0
        %v1661 = vmax.f32 %v1637, 0.0
        %v1662 = vmax.f32 %v1639, 0.0
        %v1663 = vmax.f32 %v1642, 0.0
        %v1664 = vmax.f32 %v1644, 0.0
        %v1665 = vmax.f32 %v1647, 0.0
        %v1666 = vmax.f32 %v1649, 0.0
        %s1667 = scalar_lea.vmem %s2, 320
        %v1668 = vld [vmem:[%s1667] sm:$0xf]
        %v1669 = vld [vmem:[%s1667 + $0x4] sm:$0xf]
        %v1670 = vld [vmem:[%s1667 + $0x8] sm:$0xf]
        %v1671 = vld [vmem:[%s1667 + $0xc] sm:$0xf]
        %v1672 = vld [vmem:[%s1667 + $0x10] sm:$0xf]
        %v1673 = vld [vmem:[%s1667 + $0x14] sm:$0xf]
        %v1674 = vld [vmem:[%s1667 + $0x18] sm:$0xf]
        %v1675 = vld [vmem:[%s1667 + $0x1c] sm:$0xf]
        %v1676 = vld [vmem:[%s1667 + $0x20] sm:$0xf]
        %v1677 = vld [vmem:[%s1667 + $0x24] sm:$0xf]
        %v1678 = vld [vmem:[%s1667 + $0x28] sm:$0xf]
        %v1679 = vld [vmem:[%s1667 + $0x2c] sm:$0xf]
        %v1680 = vld [vmem:[%s1667 + $0x30] sm:$0xf]
        %v1681 = vld [vmem:[%s1667 + $0x34] sm:$0xf]
        %v1682 = vld [vmem:[%s1667 + $0x38] sm:$0xf]
        %v1683 = vld [vmem:[%s1667 + $0x3c] sm:$0xf]
        %v1684 = vpack.c.bf16 %v1652, %v1651
        %v1685 = vpack.c.bf16 %v1654, %v1653
        %v1686 = vpack.c.bf16 %v1656, %v1655
        %v1687 = vpack.c.bf16 %v1658, %v1657
        %v1688 = vpack.c.bf16 %v1660, %v1659
        %v1689 = vpack.c.bf16 %v1662, %v1661
        %v1690 = vpack.c.bf16 %v1664, %v1663
        %v1691 = vpack.c.bf16 %v1666, %v1665
        %s1692 = scalar_lea.vmem %s3, 768
        %v1693 = vld [vmem:[%s1692] sm:$0xff]
        %v1694 = vld [vmem:[%s1692 + $0x8] sm:$0xff]
        %v1695 = vld [vmem:[%s1692 + $0x10] sm:$0xff]
        %v1696 = vld [vmem:[%s1692 + $0x18] sm:$0xff]
        %v1697 = vld [vmem:[%s1692 + $0x20] sm:$0xff]
        %v1698 = vld [vmem:[%s1692 + $0x28] sm:$0xff]
        %v1699 = vld [vmem:[%s1692 + $0x30] sm:$0xff]
        %v1700 = vld [vmem:[%s1692 + $0x38] sm:$0xff]
        %v1701 = vld [vmem:[%s1692 + $0x40] sm:$0xff]
        %v1702 = vld [vmem:[%s1692 + $0x48] sm:$0xff]
        %v1703 = vld [vmem:[%s1692 + $0x50] sm:$0xff]
        %v1704 = vld [vmem:[%s1692 + $0x58] sm:$0xff]
        %v1705 = vld [vmem:[%s1692 + $0x60] sm:$0xff]
        %v1706 = vld [vmem:[%s1692 + $0x68] sm:$0xff]
        %v1707 = vld [vmem:[%s1692 + $0x70] sm:$0xff]
        %v1708 = vld [vmem:[%s1692 + $0x78] sm:$0xff]
        %1710 = vset.pattern.permute.xlu0 0
        %1711 = vperm.xlu0 %1710, %v1693
        %v1712 = vpop.permute.xlu0 %1711
        %1715 = vset.pattern.permute.xlu0 0
        %1716 = vperm.xlu0 %1715, %v1694
        %v1717 = vpop.permute.xlu0 %1716
        %1720 = vset.pattern.permute.xlu0 0
        %1721 = vperm.xlu0 %1720, %v1695
        %v1722 = vpop.permute.xlu0 %1721
        %1725 = vset.pattern.permute.xlu0 0
        %1726 = vperm.xlu0 %1725, %v1696
        %v1727 = vpop.permute.xlu0 %1726
        %1730 = vset.pattern.permute.xlu0 0
        %1731 = vperm.xlu0 %1730, %v1697
        %v1732 = vpop.permute.xlu0 %1731
        %1735 = vset.pattern.permute.xlu0 0
        %1736 = vperm.xlu0 %1735, %v1698
        %v1737 = vpop.permute.xlu0 %1736
        %1740 = vset.pattern.permute.xlu0 0
        %1741 = vperm.xlu0 %1740, %v1699
        %v1742 = vpop.permute.xlu0 %1741
        %1745 = vset.pattern.permute.xlu0 0
        %1746 = vperm.xlu0 %1745, %v1700
        %v1747 = vpop.permute.xlu0 %1746
        %1750 = vset.pattern.permute.xlu0 0
        %1751 = vperm.xlu0 %1750, %v1701
        %v1752 = vpop.permute.xlu0 %1751
        %1755 = vset.pattern.permute.xlu0 0
        %1756 = vperm.xlu0 %1755, %v1702
        %v1757 = vpop.permute.xlu0 %1756
        %1760 = vset.pattern.permute.xlu0 0
        %1761 = vperm.xlu0 %1760, %v1703
        %v1762 = vpop.permute.xlu0 %1761
        %1765 = vset.pattern.permute.xlu0 0
        %1766 = vperm.xlu0 %1765, %v1704
        %v1767 = vpop.permute.xlu0 %1766
        %1770 = vset.pattern.permute.xlu0 0
        %1771 = vperm.xlu0 %1770, %v1705
        %v1772 = vpop.permute.xlu0 %1771
        %1775 = vset.pattern.permute.xlu0 0
        %1776 = vperm.xlu0 %1775, %v1706
        %v1777 = vpop.permute.xlu0 %1776
        %1780 = vset.pattern.permute.xlu0 0
        %1781 = vperm.xlu0 %1780, %v1707
        %v1782 = vpop.permute.xlu0 %1781
        %1785 = vset.pattern.permute.xlu0 0
        %1786 = vperm.xlu0 %1785, %v1708
        %v1787 = vpop.permute.xlu0 %1786
        %v1805 = vunpack.c.l.b16 %v1668
        %v1806 = vunpack.c.l.b16 %v1669
        %v1807 = vunpack.c.l.b16 %v1670
        %v1808 = vunpack.c.l.b16 %v1671
        %v1809 = vunpack.c.l.b16 %v1672
        %v1810 = vunpack.c.l.b16 %v1673
        %v1811 = vunpack.c.l.b16 %v1674
        %v1812 = vunpack.c.l.b16 %v1675
        %v1813 = vunpack.c.l.b16 %v1676
        %v1814 = vunpack.c.l.b16 %v1677
        %v1815 = vunpack.c.l.b16 %v1678
        %v1816 = vunpack.c.l.b16 %v1679
        %v1817 = vunpack.c.l.b16 %v1680
        %v1818 = vunpack.c.l.b16 %v1681
        %v1819 = vunpack.c.l.b16 %v1682
        %v1820 = vunpack.c.l.b16 %v1683
        %v1821 = vpack.c.b16 %v1806, %v1805
        %v1822 = vpack.c.b16 %v1808, %v1807
        %v1823 = vpack.c.b16 %v1810, %v1809
        %v1824 = vpack.c.b16 %v1812, %v1811
        %v1825 = vpack.c.b16 %v1814, %v1813
        %v1826 = vpack.c.b16 %v1816, %v1815
        %v1827 = vpack.c.b16 %v1818, %v1817
        %v1828 = vpack.c.b16 %v1820, %v1819
        %1837 = vmatpush.bf16.msra.mxu0 %v1691
        %1838 = vmatpush.bf16.msra.mxu0 %v1690
        %1839 = vmatpush.bf16.msra.mxu0 %v1689
        %1840 = vmatpush.bf16.msra.mxu0 %v1688
        %1841 = vmatpush.bf16.msra.mxu0 %v1687
        %1842 = vmatpush.bf16.msra.mxu0 %v1686
        %1843 = vmatpush.bf16.msra.mxu0 %v1685
        %1844 = vmatpush.bf16.msra.mxu0 %v1684
        %1845 = vmatmul.bf16.gmra.mxu0 %v1821
        %v1846 = vpop.f32.mrf.mxu0
        %v1847 = vadd.f32 %v1712, %v1846
        %v1848 = vpop.f32.mrf.mxu0
        %v1849 = vadd.f32 %v1717, %v1848
        %1850 = vmatmul.bf16.gmra.mxu0 %v1822
        %v1851 = vpop.f32.mrf.mxu0
        %v1852 = vadd.f32 %v1722, %v1851
        %v1853 = vpop.f32.mrf.mxu0
        %v1854 = vadd.f32 %v1727, %v1853
        %1855 = vmatmul.bf16.gmra.mxu0 %v1823
        %v1856 = vpop.f32.mrf.mxu0
        %v1857 = vadd.f32 %v1732, %v1856
        %v1858 = vpop.f32.mrf.mxu0
        %v1859 = vadd.f32 %v1737, %v1858
        %1860 = vmatmul.bf16.gmra.mxu0 %v1824
        %v1861 = vpop.f32.mrf.mxu0
        %v1862 = vadd.f32 %v1742, %v1861
        %v1863 = vpop.f32.mrf.mxu0
        %v1864 = vadd.f32 %v1747, %v1863
        %1865 = vmatmul.bf16.gmra.mxu0 %v1825
        %v1866 = vpop.f32.mrf.mxu0
        %v1867 = vadd.f32 %v1752, %v1866
        %v1868 = vpop.f32.mrf.mxu0
        %v1869 = vadd.f32 %v1757, %v1868
        %1870 = vmatmul.bf16.gmra.mxu0 %v1826
        %v1871 = vpop.f32.mrf.mxu0
        %v1872 = vadd.f32 %v1762, %v1871
        %v1873 = vpop.f32.mrf.mxu0
        %v1874 = vadd.f32 %v1767, %v1873
        %1875 = vmatmul.bf16.gmra.mxu0 %v1827
        %v1876 = vpop.f32.mrf.mxu0
        %v1877 = vadd.f32 %v1772, %v1876
        %v1878 = vpop.f32.mrf.mxu0
        %v1879 = vadd.f32 %v1777, %v1878
        %1880 = vmatmul.bf16.gmra.mxu0 %v1828
        %v1881 = vpop.f32.mrf.mxu0
        %v1882 = vadd.f32 %v1782, %v1881
        %v1883 = vpop.f32.mrf.mxu0
        %v1884 = vadd.f32 %v1787, %v1883
        %1885 = vdwg.mxu0
        %v1886 = vmax.f32 %v1847, 0.0
        %v1887 = vmax.f32 %v1849, 0.0
        %v1888 = vmax.f32 %v1852, 0.0
        %v1889 = vmax.f32 %v1854, 0.0
        %v1890 = vmax.f32 %v1857, 0.0
        %v1891 = vmax.f32 %v1859, 0.0
        %v1892 = vmax.f32 %v1862, 0.0
        %v1893 = vmax.f32 %v1864, 0.0
        %v1894 = vmax.f32 %v1867, 0.0
        %v1895 = vmax.f32 %v1869, 0.0
        %v1896 = vmax.f32 %v1872, 0.0
        %v1897 = vmax.f32 %v1874, 0.0
        %v1898 = vmax.f32 %v1877, 0.0
        %v1899 = vmax.f32 %v1879, 0.0
        %v1900 = vmax.f32 %v1882, 0.0
        %v1901 = vmax.f32 %v1884, 0.0
        %s1902 = scalar_lea.vmem %s2, 384
        %v1903 = vld [vmem:[%s1902] sm:$0xf]
        %v1904 = vld [vmem:[%s1902 + $0x4] sm:$0xf]
        %v1905 = vld [vmem:[%s1902 + $0x8] sm:$0xf]
        %v1906 = vld [vmem:[%s1902 + $0xc] sm:$0xf]
        %v1907 = vld [vmem:[%s1902 + $0x10] sm:$0xf]
        %v1908 = vld [vmem:[%s1902 + $0x14] sm:$0xf]
        %v1909 = vld [vmem:[%s1902 + $0x18] sm:$0xf]
        %v1910 = vld [vmem:[%s1902 + $0x1c] sm:$0xf]
        %v1911 = vld [vmem:[%s1902 + $0x20] sm:$0xf]
        %v1912 = vld [vmem:[%s1902 + $0x24] sm:$0xf]
        %v1913 = vld [vmem:[%s1902 + $0x28] sm:$0xf]
        %v1914 = vld [vmem:[%s1902 + $0x2c] sm:$0xf]
        %v1915 = vld [vmem:[%s1902 + $0x30] sm:$0xf]
        %v1916 = vld [vmem:[%s1902 + $0x34] sm:$0xf]
        %v1917 = vld [vmem:[%s1902 + $0x38] sm:$0xf]
        %v1918 = vld [vmem:[%s1902 + $0x3c] sm:$0xf]
        %v1919 = vpack.c.bf16 %v1887, %v1886
        %v1920 = vpack.c.bf16 %v1889, %v1888
        %v1921 = vpack.c.bf16 %v1891, %v1890
        %v1922 = vpack.c.bf16 %v1893, %v1892
        %v1923 = vpack.c.bf16 %v1895, %v1894
        %v1924 = vpack.c.bf16 %v1897, %v1896
        %v1925 = vpack.c.bf16 %v1899, %v1898
        %v1926 = vpack.c.bf16 %v1901, %v1900
        %s1927 = scalar_lea.vmem %s3, 896
        %v1928 = vld [vmem:[%s1927] sm:$0xff]
        %v1929 = vld [vmem:[%s1927 + $0x8] sm:$0xff]
        %v1930 = vld [vmem:[%s1927 + $0x10] sm:$0xff]
        %v1931 = vld [vmem:[%s1927 + $0x18] sm:$0xff]
        %v1932 = vld [vmem:[%s1927 + $0x20] sm:$0xff]
        %v1933 = vld [vmem:[%s1927 + $0x28] sm:$0xff]
        %v1934 = vld [vmem:[%s1927 + $0x30] sm:$0xff]
        %v1935 = vld [vmem:[%s1927 + $0x38] sm:$0xff]
        %v1936 = vld [vmem:[%s1927 + $0x40] sm:$0xff]
        %v1937 = vld [vmem:[%s1927 + $0x48] sm:$0xff]
        %v1938 = vld [vmem:[%s1927 + $0x50] sm:$0xff]
        %v1939 = vld [vmem:[%s1927 + $0x58] sm:$0xff]
        %v1940 = vld [vmem:[%s1927 + $0x60] sm:$0xff]
        %v1941 = vld [vmem:[%s1927 + $0x68] sm:$0xff]
        %v1942 = vld [vmem:[%s1927 + $0x70] sm:$0xff]
        %v1943 = vld [vmem:[%s1927 + $0x78] sm:$0xff]
        %1945 = vset.pattern.permute.xlu0 0
        %1946 = vperm.xlu0 %1945, %v1928
        %v1947 = vpop.permute.xlu0 %1946
        %1950 = vset.pattern.permute.xlu0 0
        %1951 = vperm.xlu0 %1950, %v1929
        %v1952 = vpop.permute.xlu0 %1951
        %1955 = vset.pattern.permute.xlu0 0
        %1956 = vperm.xlu0 %1955, %v1930
        %v1957 = vpop.permute.xlu0 %1956
        %1960 = vset.pattern.permute.xlu0 0
        %1961 = vperm.xlu0 %1960, %v1931
        %v1962 = vpop.permute.xlu0 %1961
        %1965 = vset.pattern.permute.xlu0 0
        %1966 = vperm.xlu0 %1965, %v1932
        %v1967 = vpop.permute.xlu0 %1966
        %1970 = vset.pattern.permute.xlu0 0
        %1971 = vperm.xlu0 %1970, %v1933
        %v1972 = vpop.permute.xlu0 %1971
        %1975 = vset.pattern.permute.xlu0 0
        %1976 = vperm.xlu0 %1975, %v1934
        %v1977 = vpop.permute.xlu0 %1976
        %1980 = vset.pattern.permute.xlu0 0
        %1981 = vperm.xlu0 %1980, %v1935
        %v1982 = vpop.permute.xlu0 %1981
        %1985 = vset.pattern.permute.xlu0 0
        %1986 = vperm.xlu0 %1985, %v1936
        %v1987 = vpop.permute.xlu0 %1986
        %1990 = vset.pattern.permute.xlu0 0
        %1991 = vperm.xlu0 %1990, %v1937
        %v1992 = vpop.permute.xlu0 %1991
        %1995 = vset.pattern.permute.xlu0 0
        %1996 = vperm.xlu0 %1995, %v1938
        %v1997 = vpop.permute.xlu0 %1996
        %2000 = vset.pattern.permute.xlu0 0
        %2001 = vperm.xlu0 %2000, %v1939
        %v2002 = vpop.permute.xlu0 %2001
        %2005 = vset.pattern.permute.xlu0 0
        %2006 = vperm.xlu0 %2005, %v1940
        %v2007 = vpop.permute.xlu0 %2006
        %2010 = vset.pattern.permute.xlu0 0
        %2011 = vperm.xlu0 %2010, %v1941
        %v2012 = vpop.permute.xlu0 %2011
        %2015 = vset.pattern.permute.xlu0 0
        %2016 = vperm.xlu0 %2015, %v1942
        %v2017 = vpop.permute.xlu0 %2016
        %2020 = vset.pattern.permute.xlu0 0
        %2021 = vperm.xlu0 %2020, %v1943
        %v2022 = vpop.permute.xlu0 %2021
        %v2040 = vunpack.c.l.b16 %v1903
        %v2041 = vunpack.c.l.b16 %v1904
        %v2042 = vunpack.c.l.b16 %v1905
        %v2043 = vunpack.c.l.b16 %v1906
        %v2044 = vunpack.c.l.b16 %v1907
        %v2045 = vunpack.c.l.b16 %v1908
        %v2046 = vunpack.c.l.b16 %v1909
        %v2047 = vunpack.c.l.b16 %v1910
        %v2048 = vunpack.c.l.b16 %v1911
        %v2049 = vunpack.c.l.b16 %v1912
        %v2050 = vunpack.c.l.b16 %v1913
        %v2051 = vunpack.c.l.b16 %v1914
        %v2052 = vunpack.c.l.b16 %v1915
        %v2053 = vunpack.c.l.b16 %v1916
        %v2054 = vunpack.c.l.b16 %v1917
        %v2055 = vunpack.c.l.b16 %v1918
        %v2056 = vpack.c.b16 %v2041, %v2040
        %v2057 = vpack.c.b16 %v2043, %v2042
        %v2058 = vpack.c.b16 %v2045, %v2044
        %v2059 = vpack.c.b16 %v2047, %v2046
        %v2060 = vpack.c.b16 %v2049, %v2048
        %v2061 = vpack.c.b16 %v2051, %v2050
        %v2062 = vpack.c.b16 %v2053, %v2052
        %v2063 = vpack.c.b16 %v2055, %v2054
        %2072 = vmatpush.bf16.msra.mxu0 %v1926
        %2073 = vmatpush.bf16.msra.mxu0 %v1925
        %2074 = vmatpush.bf16.msra.mxu0 %v1924
        %2075 = vmatpush.bf16.msra.mxu0 %v1923
        %2076 = vmatpush.bf16.msra.mxu0 %v1922
        %2077 = vmatpush.bf16.msra.mxu0 %v1921
        %2078 = vmatpush.bf16.msra.mxu0 %v1920
        %2079 = vmatpush.bf16.msra.mxu0 %v1919
        %2080 = vmatmul.bf16.gmra.mxu0 %v2056
        %v2081 = vpop.f32.mrf.mxu0
        %v2082 = vadd.f32 %v1947, %v2081
        %v2083 = vpop.f32.mrf.mxu0
        %v2084 = vadd.f32 %v1952, %v2083
        %2085 = vmatmul.bf16.gmra.mxu0 %v2057
        %v2086 = vpop.f32.mrf.mxu0
        %v2087 = vadd.f32 %v1957, %v2086
        %v2088 = vpop.f32.mrf.mxu0
        %v2089 = vadd.f32 %v1962, %v2088
        %2090 = vmatmul.bf16.gmra.mxu0 %v2058
        %v2091 = vpop.f32.mrf.mxu0
        %v2092 = vadd.f32 %v1967, %v2091
        %v2093 = vpop.f32.mrf.mxu0
        %v2094 = vadd.f32 %v1972, %v2093
        %2095 = vmatmul.bf16.gmra.mxu0 %v2059
        %v2096 = vpop.f32.mrf.mxu0
        %v2097 = vadd.f32 %v1977, %v2096
        %v2098 = vpop.f32.mrf.mxu0
        %v2099 = vadd.f32 %v1982, %v2098
        %2100 = vmatmul.bf16.gmra.mxu0 %v2060
        %v2101 = vpop.f32.mrf.mxu0
        %v2102 = vadd.f32 %v1987, %v2101
        %v2103 = vpop.f32.mrf.mxu0
        %v2104 = vadd.f32 %v1992, %v2103
        %2105 = vmatmul.bf16.gmra.mxu0 %v2061
        %v2106 = vpop.f32.mrf.mxu0
        %v2107 = vadd.f32 %v1997, %v2106
        %v2108 = vpop.f32.mrf.mxu0
        %v2109 = vadd.f32 %v2002, %v2108
        %2110 = vmatmul.bf16.gmra.mxu0 %v2062
        %v2111 = vpop.f32.mrf.mxu0
        %v2112 = vadd.f32 %v2007, %v2111
        %v2113 = vpop.f32.mrf.mxu0
        %v2114 = vadd.f32 %v2012, %v2113
        %2115 = vmatmul.bf16.gmra.mxu0 %v2063
        %v2116 = vpop.f32.mrf.mxu0
        %v2117 = vadd.f32 %v2017, %v2116
        %v2118 = vpop.f32.mrf.mxu0
        %v2119 = vadd.f32 %v2022, %v2118
        %2120 = vdwg.mxu0
        %v2121 = vmax.f32 %v2082, 0.0
        %v2122 = vmax.f32 %v2084, 0.0
        %v2123 = vmax.f32 %v2087, 0.0
        %v2124 = vmax.f32 %v2089, 0.0
        %v2125 = vmax.f32 %v2092, 0.0
        %v2126 = vmax.f32 %v2094, 0.0
        %v2127 = vmax.f32 %v2097, 0.0
        %v2128 = vmax.f32 %v2099, 0.0
        %v2129 = vmax.f32 %v2102, 0.0
        %v2130 = vmax.f32 %v2104, 0.0
        %v2131 = vmax.f32 %v2107, 0.0
        %v2132 = vmax.f32 %v2109, 0.0
        %v2133 = vmax.f32 %v2112, 0.0
        %v2134 = vmax.f32 %v2114, 0.0
        %v2135 = vmax.f32 %v2117, 0.0
        %v2136 = vmax.f32 %v2119, 0.0
        %s2137 = scalar_lea.vmem %s2, 448
        %v2138 = vld [vmem:[%s2137] sm:$0xf]
        %v2139 = vld [vmem:[%s2137 + $0x4] sm:$0xf]
        %v2140 = vld [vmem:[%s2137 + $0x8] sm:$0xf]
        %v2141 = vld [vmem:[%s2137 + $0xc] sm:$0xf]
        %v2142 = vld [vmem:[%s2137 + $0x10] sm:$0xf]
        %v2143 = vld [vmem:[%s2137 + $0x14] sm:$0xf]
        %v2144 = vld [vmem:[%s2137 + $0x18] sm:$0xf]
        %v2145 = vld [vmem:[%s2137 + $0x1c] sm:$0xf]
        %v2146 = vld [vmem:[%s2137 + $0x20] sm:$0xf]
        %v2147 = vld [vmem:[%s2137 + $0x24] sm:$0xf]
        %v2148 = vld [vmem:[%s2137 + $0x28] sm:$0xf]
        %v2149 = vld [vmem:[%s2137 + $0x2c] sm:$0xf]
        %v2150 = vld [vmem:[%s2137 + $0x30] sm:$0xf]
        %v2151 = vld [vmem:[%s2137 + $0x34] sm:$0xf]
        %v2152 = vld [vmem:[%s2137 + $0x38] sm:$0xf]
        %v2153 = vld [vmem:[%s2137 + $0x3c] sm:$0xf]
        %v2154 = vpack.c.bf16 %v2122, %v2121
        %v2155 = vpack.c.bf16 %v2124, %v2123
        %v2156 = vpack.c.bf16 %v2126, %v2125
        %v2157 = vpack.c.bf16 %v2128, %v2127
        %v2158 = vpack.c.bf16 %v2130, %v2129
        %v2159 = vpack.c.bf16 %v2132, %v2131
        %v2160 = vpack.c.bf16 %v2134, %v2133
        %v2161 = vpack.c.bf16 %v2136, %v2135
        %s2162 = scalar_lea.vmem %s3, 1024
        %v2163 = vld [vmem:[%s2162] sm:$0xff]
        %v2164 = vld [vmem:[%s2162 + $0x8] sm:$0xff]
        %v2165 = vld [vmem:[%s2162 + $0x10] sm:$0xff]
        %v2166 = vld [vmem:[%s2162 + $0x18] sm:$0xff]
        %v2167 = vld [vmem:[%s2162 + $0x20] sm:$0xff]
        %v2168 = vld [vmem:[%s2162 + $0x28] sm:$0xff]
        %v2169 = vld [vmem:[%s2162 + $0x30] sm:$0xff]
        %v2170 = vld [vmem:[%s2162 + $0x38] sm:$0xff]
        %v2171 = vld [vmem:[%s2162 + $0x40] sm:$0xff]
        %v2172 = vld [vmem:[%s2162 + $0x48] sm:$0xff]
        %v2173 = vld [vmem:[%s2162 + $0x50] sm:$0xff]
        %v2174 = vld [vmem:[%s2162 + $0x58] sm:$0xff]
        %v2175 = vld [vmem:[%s2162 + $0x60] sm:$0xff]
        %v2176 = vld [vmem:[%s2162 + $0x68] sm:$0xff]
        %v2177 = vld [vmem:[%s2162 + $0x70] sm:$0xff]
        %v2178 = vld [vmem:[%s2162 + $0x78] sm:$0xff]
        %2180 = vset.pattern.permute.xlu0 0
        %2181 = vperm.xlu0 %2180, %v2163
        %v2182 = vpop.permute.xlu0 %2181
        %2185 = vset.pattern.permute.xlu0 0
        %2186 = vperm.xlu0 %2185, %v2164
        %v2187 = vpop.permute.xlu0 %2186
        %2189 = vset.pattern.permute.xlu0 0
        %2190 = vperm.xlu0 %2189, %v2165
        %v2191 = vpop.permute.xlu0 %2190
        %2193 = vset.pattern.permute.xlu0 0
        %2194 = vperm.xlu0 %2193, %v2166
        %v2195 = vpop.permute.xlu0 %2194
        %2197 = vset.pattern.permute.xlu0 0
        %2198 = vperm.xlu0 %2197, %v2167
        %v2199 = vpop.permute.xlu0 %2198
        %2201 = vset.pattern.permute.xlu0 0
        %2202 = vperm.xlu0 %2201, %v2168
        %v2203 = vpop.permute.xlu0 %2202
        %2205 = vset.pattern.permute.xlu0 0
        %2206 = vperm.xlu0 %2205, %v2169
        %v2207 = vpop.permute.xlu0 %2206
        %2209 = vset.pattern.permute.xlu0 0
        %2210 = vperm.xlu0 %2209, %v2170
        %v2211 = vpop.permute.xlu0 %2210
        %2213 = vset.pattern.permute.xlu0 0
        %2214 = vperm.xlu0 %2213, %v2171
        %v2215 = vpop.permute.xlu0 %2214
        %2217 = vset.pattern.permute.xlu0 0
        %2218 = vperm.xlu0 %2217, %v2172
        %v2219 = vpop.permute.xlu0 %2218
        %2221 = vset.pattern.permute.xlu0 0
        %2222 = vperm.xlu0 %2221, %v2173
        %v2223 = vpop.permute.xlu0 %2222
        %2225 = vset.pattern.permute.xlu0 0
        %2226 = vperm.xlu0 %2225, %v2174
        %v2227 = vpop.permute.xlu0 %2226
        %2229 = vset.pattern.permute.xlu0 0
        %2230 = vperm.xlu0 %2229, %v2175
        %v2231 = vpop.permute.xlu0 %2230
        %2233 = vset.pattern.permute.xlu0 0
        %2234 = vperm.xlu0 %2233, %v2176
        %v2235 = vpop.permute.xlu0 %2234
        %2237 = vset.pattern.permute.xlu0 0
        %2238 = vperm.xlu0 %2237, %v2177
        %v2239 = vpop.permute.xlu0 %2238
        %2241 = vset.pattern.permute.xlu0 0
        %2242 = vperm.xlu0 %2241, %v2178
        %v2243 = vpop.permute.xlu0 %2242
        %v2260 = vunpack.c.l.b16 %v2138
        %v2261 = vunpack.c.l.b16 %v2139
        %v2262 = vunpack.c.l.b16 %v2140
        %v2263 = vunpack.c.l.b16 %v2141
        %v2264 = vunpack.c.l.b16 %v2142
        %v2265 = vunpack.c.l.b16 %v2143
        %v2266 = vunpack.c.l.b16 %v2144
        %v2267 = vunpack.c.l.b16 %v2145
        %v2268 = vunpack.c.l.b16 %v2146
        %v2269 = vunpack.c.l.b16 %v2147
        %v2270 = vunpack.c.l.b16 %v2148
        %v2271 = vunpack.c.l.b16 %v2149
        %v2272 = vunpack.c.l.b16 %v2150
        %v2273 = vunpack.c.l.b16 %v2151
        %v2274 = vunpack.c.l.b16 %v2152
        %v2275 = vunpack.c.l.b16 %v2153
        %v2276 = vpack.c.b16 %v2261, %v2260
        %v2277 = vpack.c.b16 %v2263, %v2262
        %v2278 = vpack.c.b16 %v2265, %v2264
        %v2279 = vpack.c.b16 %v2267, %v2266
        %v2280 = vpack.c.b16 %v2269, %v2268
        %v2281 = vpack.c.b16 %v2271, %v2270
        %v2282 = vpack.c.b16 %v2273, %v2272
        %v2283 = vpack.c.b16 %v2275, %v2274
        %2292 = vmatpush.bf16.msra.mxu0 %v2161
        %2293 = vmatpush.bf16.msra.mxu0 %v2160
        %2294 = vmatpush.bf16.msra.mxu0 %v2159
        %2295 = vmatpush.bf16.msra.mxu0 %v2158
        %2296 = vmatpush.bf16.msra.mxu0 %v2157
        %2297 = vmatpush.bf16.msra.mxu0 %v2156
        %2298 = vmatpush.bf16.msra.mxu0 %v2155
        %2299 = vmatpush.bf16.msra.mxu0 %v2154
        %2300 = vmatmul.bf16.gmra.mxu0 %v2276
        %v2301 = vpop.f32.mrf.mxu0
        %v2302 = vadd.f32 %v2182, %v2301
        %v2303 = vpop.f32.mrf.mxu0
        %2304 = vmatmul.bf16.gmra.mxu0 %v2277
        %v2305 = vpop.f32.mrf.mxu0
        %v2306 = vpop.f32.mrf.mxu0
        %2307 = vmatmul.bf16.gmra.mxu0 %v2278
        %v2308 = vpop.f32.mrf.mxu0
        %v2309 = vpop.f32.mrf.mxu0
        %2310 = vmatmul.bf16.gmra.mxu0 %v2279
        %v2311 = vpop.f32.mrf.mxu0
        %v2312 = vpop.f32.mrf.mxu0
        %2313 = vmatmul.bf16.gmra.mxu0 %v2280
        %v2314 = vpop.f32.mrf.mxu0
        %v2315 = vpop.f32.mrf.mxu0
        %2316 = vmatmul.bf16.gmra.mxu0 %v2281
        %v2317 = vpop.f32.mrf.mxu0
        %v2318 = vpop.f32.mrf.mxu0
        %2319 = vmatmul.bf16.gmra.mxu0 %v2282
        %v2320 = vpop.f32.mrf.mxu0
        %v2321 = vpop.f32.mrf.mxu0
        %2322 = vmatmul.bf16.gmra.mxu0 %v2283
        %v2323 = vpop.f32.mrf.mxu0
        %v2324 = vpop.f32.mrf.mxu0
        %2325 = vdwg.mxu0
        %2326 = vst [vmem:[%s241] sm:$0x1] %v2302
        %s2327 = sand.u32 %s115, 1
        %s2328 = scalar_lea.sflag [#allocation4], %s2327
        %s2329 = sand.u32 %s115, 1
        %s2330 = scalar_lea.vmem [#allocation3], %s2329
        // Predicated region
        $region78: #{tpu_custom_call.1} parent=72 // pred_check
          %p2331 = pneg %p125
        $region79: #{tpu_custom_call.1} parent=72 // pred_check_branch
          %2333 = sbr.rel (%p2331) target = $region81
        $region80: #{tpu_custom_call.1} parent=72 // pred_region
          %2335 = vsyncadd %s2328, 0
          %s2336 = scalar_lea.hbm %s4, %s18
          %s2338 = sshll.u32 %s2330, 4
          %s2339 = int_to_ptr.vmem [resolvable:$true] %s2338
          %s2340 = sshll.u32 %s2336, 4
          %s2341 = int_to_ptr.hbm [resolvable:$true] %s2340
          %2343 = dma.vmem_to_hbm [thread:$0]  %s2339, 16, %s2341, %s2328
        $region81: #{tpu_custom_call.1} parent=72 // pred_fallthru
          _
      $region73: #{tpu_custom_call.1} parent=5 // pred_fallthru
        _
      %p2344 = scmp.le.s32.totalorder 2, %s13
      // Predicated region
      $region82: #{tpu_custom_call.1} parent=5 // pred_check
        %p2345 = pneg %p2344
      $region83: #{tpu_custom_call.1} parent=5 // pred_check_branch
        %2347 = sbr.rel (%p2345) target = $region85
      $region84: #{tpu_custom_call.1} parent=5 // pred_region
        %s2348 = ssub.s32 %s13, 2
        // Predicated region
        $region86: #{tpu_custom_call.1} parent=84 // pred_check
          %p2349 = pneg %p131
        $region87: #{tpu_custom_call.1} parent=84 // pred_check_branch
          %2351 = sbr.rel (%p2349) target = $region89
        $region88: #{tpu_custom_call.1} parent=84 // pred_region
          %s2352 = sand.u32 %s116, 1
          %s2353 = scalar_lea.sflag [#allocation4], %s2352
          %s2354 = sand.u32 %s116, 1
          %s2355 = scalar_lea.vmem [#allocation3], %s2354
          %2357 = dma.done %s2353, 16
        $region89: #{tpu_custom_call.1} parent=84 // pred_fallthru
          _
      $region85: #{tpu_custom_call.1} parent=5 // pred_fallthru
        _
    $region6: #{tpu_custom_call.1} parent=1 // loop_footer
      %s17 = sadd.s32 1, %s13
    $region7: #{tpu_custom_call.1} parent=1 // loop_footer_branch
      %12 = sbr.rel target = $region3
    $region8: #{tpu_custom_call.1} parent=1 // loop_exit
      _
    %2358 = vsyncpa [#allocation4], 1
    %s2359 = scalar_lea.sflag [#allocation4], 1
    %2360 = vsyncpa %s2359, 1

</llo_original>
